<compile_context>
chip_gen: v7x
topology: tpu7x:2x2x1
jax: 0.10.0
libtpu: 0.0.40
codegen_flags: <defaults>
</compile_context>

<pallas_src>
import functools

import jax
import jax.numpy as jnp
from jax.experimental import pallas as pl
from jax.experimental.pallas import tpu as pltpu

HIDDEN = 32          # config.hidden_size (small synthetic size)
NUM_HEADS = 8        # nn.MultiheadAttention(num_heads=8)
HEAD_DIM = HIDDEN // NUM_HEADS
ADAPTER = 64         # LanguageAdapter(adapter_size=64)
NUM_LABELS = 5       # config.num_labels
LOGIT_PAD = 128      # lane-dense padded classifier width
MAX_POS = 512        # config.max_position_embeddings
VOCAB = 100
LN_EPS = 1e-5
LANGS = ["zh", "en", "ja", "ko", "ar", "es", "fr", "de"]

# --- packed-operand lane offsets (shared by wrapper & kernel) -------------
# weight pack (HIDDEN, ·), bf16.  Classifier block sits exactly on lane tile 1.
W_QKV = 0                         # fused, per-head-interleaved QKV   (96)
W_O = W_QKV + 3 * HIDDEN          # attention output projection       (32)
W_C = W_O + HIDDEN                # padded classifier                 (128)
W_DOWN = W_C + LOGIT_PAD          # adapter down-projection           (64, adapter only)
W_TOT_NOAD = W_DOWN               # 256
W_TOT_AD = W_DOWN + ADAPTER       # 320

# bias/gain pack (1, ·), f32
B_QKV = 0                         # fused QKV bias                    (96)
B_O = B_QKV + 3 * HIDDEN          # output-proj bias                  (32)
B_G2 = B_O + HIDDEN               # alignment LayerNorm gamma         (32)
B_BE2 = B_G2 + HIDDEN             # alignment LayerNorm beta          (32)
B_C = B_BE2 + HIDDEN              # padded classifier bias            (128)
B_DOWN = B_C + LOGIT_PAD          # adapter b_down                    (64, adapter only)
B_UP = B_DOWN + ADAPTER           # adapter b_up                      (32)
B_G1 = B_UP + HIDDEN              # adapter LayerNorm gamma           (32)
B_BE1 = B_G1 + HIDDEN             # adapter LayerNorm beta            (32)
B_TOT_NOAD = B_DOWN               # 320
B_TOT_AD = B_BE1 + HIDDEN         # 480


def _layernorm(x, g, b):
    mean = jnp.mean(x, axis=-1, keepdims=True)
    var = jnp.mean(jnp.square(x - mean), axis=-1, keepdims=True)
    return (x - mean) * jax.lax.rsqrt(var + LN_EPS) * g + b


def _fwd_kernel(*refs, apply_adapter, batch, seq_len):
    if apply_adapter:
        x_ref, wh_ref, wu_ref, b_ref, o_ref = refs
    else:
        x_ref, wh_ref, b_ref, o_ref = refs

    bf16 = jnp.bfloat16
    f32 = jnp.float32
    rows = batch * seq_len

    x = x_ref[...]                                          # (rows, H) f32, pos already added

    # ---- LanguageAdapter (compiled out when language_id not in the dict) ----
    if apply_adapter:
        resid = x
        h = jnp.dot(x.astype(bf16), wh_ref[:, W_DOWN:W_DOWN + ADAPTER],
                    preferred_element_type=f32) + b_ref[:, B_DOWN:B_DOWN + ADAPTER]
        h = jnp.maximum(h, 0.0)                             # ReLU
        up = jnp.dot(h.astype(bf16), wu_ref[...],
                     preferred_element_type=f32) + b_ref[:, B_UP:B_UP + HIDDEN]
        x = _layernorm(up + resid,
                       b_ref[:, B_G1:B_G1 + HIDDEN], b_ref[:, B_BE1:B_BE1 + HIDDEN])

    # ---- CrossLingualAlignment: 8-head self-attention + LayerNorm(x + attn) ----
    # Fused QKV; weight columns are interleaved per head as [h, (q,k,v), d] and
    # 1/sqrt(head_dim) is already folded into the q columns (wrapper side).
    qkv = jnp.dot(x.astype(bf16), wh_ref[:, W_QKV:W_QKV + 3 * HIDDEN],
                  preferred_element_type=f32) + b_ref[:, B_QKV:B_QKV + 3 * HIDDEN]
    qkv = qkv.astype(bf16)                                  # (rows, 3H)

    # Head split -> (NUM_HEADS*batch, seq, 3*HEAD_DIM): one contiguous 12-lane
    # slice per head, one stack, pure reshapes.  All heads then go through a
    # SINGLE score einsum / softmax / PV einsum (no per-head loop).
    chunks = [qkv[:, hh * 3 * HEAD_DIM:(hh + 1) * 3 * HEAD_DIM]
              for hh in range(NUM_HEADS)]
    t = jnp.stack(chunks, axis=0)                           # (NH, rows, 3*hd)
    t = t.reshape(NUM_HEADS * batch, seq_len, 3 * HEAD_DIM) # batch index = h*B + b
    q = t[:, :, :HEAD_DIM]
    k = t[:, :, HEAD_DIM:2 * HEAD_DIM]
    v = t[:, :, 2 * HEAD_DIM:]

    s = jnp.einsum('bqd,bkd->bqk', q, k, preferred_element_type=f32)   # (NH*B, S, S)
    s = s - jnp.max(s, axis=-1, keepdims=True)
    p = jnp.exp(s)
    p = p * pl.reciprocal(jnp.sum(p, axis=-1, keepdims=True), approx=True)
    o = jnp.einsum('bqk,bkd->bqd', p.astype(bf16), v,
                   preferred_element_type=f32).astype(bf16)             # (NH*B, S, hd)

    # Merge heads back to (rows, HIDDEN) and apply ONE K=32 output projection.
    om = jnp.concatenate([o[hh * batch:(hh + 1) * batch] for hh in range(NUM_HEADS)],
                         axis=-1)                                        # (B, S, H)
    y = jnp.dot(om.reshape(rows, HIDDEN), wh_ref[:, W_O:W_O + HIDDEN],
                preferred_element_type=f32) + b_ref[:, B_O:B_O + HIDDEN]

    x = _layernorm(x + y, b_ref[:, B_G2:B_G2 + HIDDEN], b_ref[:, B_BE2:B_BE2 + HIDDEN])

    # ---- classifier (padded to 128 lanes -> lane-dense bf16 store) ----
    logits = jnp.dot(x.astype(bf16), wh_ref[:, W_C:W_C + LOGIT_PAD],
                     preferred_element_type=f32) + b_ref[:, B_C:B_C + LOGIT_PAD]
    o_ref[...] = logits.astype(o_ref.dtype)


def init_params(key):
    keys = iter(jax.random.split(key, 64))

    def nrm(shape, scale=0.02):
        return (scale * jax.random.normal(next(keys), shape)).astype(jnp.float32)

    adapters = {}
    for lang in LANGS:
        adapters[lang] = {
            "w_down": nrm((HIDDEN, ADAPTER)),
            "b_down": jnp.zeros((ADAPTER,), jnp.float32),
            "w_up": nrm((ADAPTER, HIDDEN)),
            "b_up": jnp.zeros((HIDDEN,), jnp.float32),
            "ln_g": jnp.ones((HIDDEN,), jnp.float32),
            "ln_b": jnp.zeros((HIDDEN,), jnp.float32),
        }

    params = {
        # TODO(synk): pretrained XLM-RoBERTa encoder has no Pallas equivalent;
        # replaced by a deterministic token-embedding table producing last_hidden_state.
        "token_emb": nrm((VOCAB, HIDDEN), scale=0.1),
        "pos_emb": nrm((MAX_POS, HIDDEN), scale=0.1),
        "adapters": adapters,
        "attn": {
            "wq": nrm((HIDDEN, HIDDEN)), "bq": jnp.zeros((HIDDEN,), jnp.float32),
            "wk": nrm((HIDDEN, HIDDEN)), "bk": jnp.zeros((HIDDEN,), jnp.float32),
            "wv": nrm((HIDDEN, HIDDEN)), "bv": jnp.zeros((HIDDEN,), jnp.float32),
            "wo": nrm((HIDDEN, HIDDEN)), "bo": jnp.zeros((HIDDEN,), jnp.float32),
            "ln_g": jnp.ones((HIDDEN,), jnp.float32),
            "ln_b": jnp.zeros((HIDDEN,), jnp.float32),
        },
        "classifier": {
            "w": nrm((HIDDEN, NUM_LABELS)),
            "b": jnp.zeros((NUM_LABELS,), jnp.float32),
        },
    }
    return params


def cross_lingual_layoutlm_forward(input_ids, bbox, attention_mask, language_id, params):
    B, S = input_ids.shape
    # TODO(synk): attention_mask only feeds the (replaced) XLM-R encoder in the
    # reference model; the MultiheadAttention call has no key_padding_mask.
    del attention_mask
    del bbox  # reference get_position_embeddings uses only bbox.size(1) == S

    rows = B * S
    bf16 = jnp.bfloat16
    f32 = jnp.float32

    # glue: backbone replacement + position embeddings (position_ids = arange(S)),
    # added next to the gather so the kernel gets one activation input.
    seq = params["token_emb"][input_ids].astype(f32) + params["pos_emb"][:S][None].astype(f32)
    x = seq.reshape(rows, HIDDEN)

    apply_adapter = language_id in params["adapters"]
    attn = params["attn"]
    cls = params["classifier"]
    scale = 1.0 / (HEAD_DIM ** 0.5)

    # Fused QKV weight/bias, columns interleaved per head as [h, (q,k,v), d],
    # 1/sqrt(head_dim) folded into the q columns once.
    wqkv = jnp.stack([attn["wq"] * scale, attn["wk"], attn["wv"]], axis=1)       # (H, 3, H)
    wqkv = wqkv.reshape(HIDDEN, 3, NUM_HEADS, HEAD_DIM).transpose(0, 2, 1, 3)
    wqkv = wqkv.reshape(HIDDEN, 3 * HIDDEN)
    bqkv = jnp.stack([attn["bq"] * scale, attn["bk"], attn["bv"]], axis=0)        # (3, H)
    bqkv = bqkv.reshape(3, NUM_HEADS, HEAD_DIM).transpose(1, 0, 2).reshape(3 * HIDDEN)

    # classifier padded to 128 output lanes (lane-dense store)
    wc_pad = jnp.zeros((HIDDEN, LOGIT_PAD), f32).at[:, :NUM_LABELS].set(cls["w"])
    bc_pad = jnp.zeros((LOGIT_PAD,), f32).at[:NUM_LABELS].set(cls["b"])

    # ---- pack operands: one weight ref, one bias ref (plus adapter up-proj) ----
    if apply_adapter:
        ad = params["adapters"][language_id]
        w_pack = jnp.concatenate([wqkv, attn["wo"], wc_pad, ad["w_down"]], axis=1).astype(bf16)
        b_pack = jnp.concatenate(
            [bqkv, attn["bo"], attn["ln_g"], attn["ln_b"], bc_pad,
             ad["b_down"], ad["b_up"], ad["ln_g"], ad["ln_b"]]).reshape(1, -1).astype(f32)
        args = (x, w_pack, ad["w_up"].astype(bf16), b_pack)
    else:
        # no adapter for this language: do not ship unused adapter refs at all
        w_pack = jnp.concatenate([wqkv, attn["wo"], wc_pad], axis=1).astype(bf16)
        b_pack = jnp.concatenate(
            [bqkv, attn["bo"], attn["ln_g"], attn["ln_b"], bc_pad]).reshape(1, -1).astype(f32)
        args = (x, w_pack, b_pack)

    def full_spec(a):
        nd = a.ndim
        return pl.BlockSpec(a.shape, lambda i, _nd=nd: (0,) * _nd)

    in_specs = [full_spec(a) for a in args]
    out_spec = pl.BlockSpec((rows, LOGIT_PAD), lambda i: (0, 0))

    kernel = functools.partial(_fwd_kernel, apply_adapter=apply_adapter,
                               batch=B, seq_len=S)

    # Advisory cost estimate so XLA can overlap the embedding gather with the kernel.
    per_tok_flops = (
        2 * HIDDEN * 3 * HIDDEN                           # fused QKV
        + 4 * S * HIDDEN                                  # scores + attn@V (all heads)
        + 2 * HIDDEN * HIDDEN                             # output projection
        + 2 * HIDDEN * LOGIT_PAD                          # classifier
        + (4 * HIDDEN * ADAPTER if apply_adapter else 0)  # adapter down+up
    )
    cost = pl.CostEstimate(
        flops=int(rows * per_tok_flops),
        transcendentals=int(rows * NUM_HEADS * (S + 1)),
        bytes_accessed=int(sum(int(a.size) * a.dtype.itemsize for a in args)
                           + rows * LOGIT_PAD * 2),
    )

    # Single-block grid: whole batch in one step (best for 1-TC v5e/v6e at these
    # shapes).  For large B on v7x, tile the batch over a CORE_PARALLEL grid
    # axis instead, keeping the per-step footprint under the 32 MiB scoped VMEM.
    out = pl.pallas_call(
        kernel,
        out_shape=jax.ShapeDtypeStruct((rows, LOGIT_PAD), jnp.bfloat16),
        grid_spec=pltpu.PrefetchScalarGridSpec(
            num_scalar_prefetch=0,
            grid=(1,),
            in_specs=in_specs,
            out_specs=out_spec,
        ),
        compiler_params=pltpu.CompilerParams(
            dimension_semantics=("arbitrary",),
        ),
        cost_estimate=cost,
    )(*args)

    logits = out[:, :NUM_LABELS].astype(jnp.float32).reshape(B, S, NUM_LABELS)
    return {"logits": logits}


if __name__ == "__main__":
    key = jax.random.PRNGKey(0)
    pkey, dkey = jax.random.split(key)
    params = init_params(pkey)

    B, S = 2, 8
    k1, k2 = jax.random.split(dkey)
    input_ids = jax.random.randint(k1, (B, S), 0, VOCAB)
    bbox = jax.random.randint(k2, (B, S, 4), 0, 1000)
    attention_mask = jnp.ones((B, S), jnp.int32)

    out = cross_lingual_layoutlm_forward(input_ids, bbox, attention_mask, "en", params)
    logits = jax.block_until_ready(out["logits"])
    assert logits.shape == (B, S, NUM_LABELS)
    assert bool(jnp.all(jnp.isfinite(logits)))
    print("KERNEL_OK")
</pallas_src>

<mosaic_0001>
module attributes {stable_mosaic.version = 11 : i64} {
  func.func @_fwd_kernel(%arg0: i32, %arg1: memref<16x32xf32, #tpu.memory_space<vmem>>, %arg2: memref<32x320xbf16, #tpu.memory_space<vmem>>, %arg3: memref<64x32xbf16, #tpu.memory_space<vmem>>, %arg4: memref<1x480xf32, #tpu.memory_space<vmem>>, %arg5: memref<16x128xbf16, #tpu.memory_space<vmem>>) attributes {dimension_semantics = [#tpu.dimension_semantics<arbitrary>], iteration_bounds = array<i64: 1>, scalar_prefetch = 0 : i64, scratch_operands = 0 : i64, tpu.core_type = #tpu.core_type<tc>, window_params = [{pipeline_mode = #tpu.pipeline_mode<synchronous>, transform_indices = @transform_0, window_bounds = array<i64: 16, 32>}, {pipeline_mode = #tpu.pipeline_mode<synchronous>, transform_indices = @transform_1, window_bounds = array<i64: 32, 320>}, {pipeline_mode = #tpu.pipeline_mode<synchronous>, transform_indices = @transform_2, window_bounds = array<i64: 64, 32>}, {pipeline_mode = #tpu.pipeline_mode<synchronous>, transform_indices = @transform_3, window_bounds = array<i64: 1, 480>}, {pipeline_mode = #tpu.pipeline_mode<synchronous>, transform_indices = @transform_4, window_bounds = array<i64: 16, 128>}]} {
    %c0 = arith.constant 0 : index
    %c0_0 = arith.constant 0 : index
    %0 = vector.load %arg1[%c0, %c0_0] : memref<16x32xf32, #tpu.memory_space<vmem>>, vector<16x32xf32>
    %1 = arith.truncf %0 : vector<16x32xf32> to vector<16x32xbf16>
    %c0_1 = arith.constant 0 : index
    %c256 = arith.constant 256 : index
    %2 = vector.load %arg2[%c0_1, %c256] : memref<32x320xbf16, #tpu.memory_space<vmem>>, vector<32x64xbf16>
    %cst = arith.constant dense<0.000000e+00> : vector<16x64xf32>
    %3 = tpu.matmul %1, %2, %cst {dimension_numbers = #tpu.dot_dimension_numbers<[1], [0], [0], [1], [0, 0, 1, 1], [], []>} : vector<16x32xbf16>, vector<32x64xbf16>, vector<16x64xf32> -> vector<16x64xf32>
    %c0_2 = arith.constant 0 : index
    %c320 = arith.constant 320 : index
    %4 = vector.load %arg4[%c0_2, %c320] : memref<1x480xf32, #tpu.memory_space<vmem>>, vector<1x64xf32>
    %5 = vector.broadcast %4 : vector<1x64xf32> to vector<16x64xf32>
    %6 = arith.addf %3, %5 : vector<16x64xf32>
    %cst_3 = arith.constant 0.000000e+00 : f32
    %7 = vector.broadcast %cst_3 : f32 to vector<16x64xf32>
    %8 = arith.maximumf %6, %7 : vector<16x64xf32>
    %9 = arith.truncf %8 : vector<16x64xf32> to vector<16x64xbf16>
    %c0_4 = arith.constant 0 : index
    %c0_5 = arith.constant 0 : index
    %10 = vector.load %arg3[%c0_4, %c0_5] : memref<64x32xbf16, #tpu.memory_space<vmem>>, vector<64x32xbf16>
    %cst_6 = arith.constant dense<0.000000e+00> : vector<16x32xf32>
    %11 = tpu.matmul %9, %10, %cst_6 {dimension_numbers = #tpu.dot_dimension_numbers<[1], [0], [0], [1], [0, 0, 1, 1], [], []>} : vector<16x64xbf16>, vector<64x32xbf16>, vector<16x32xf32> -> vector<16x32xf32>
    %c0_7 = arith.constant 0 : index
    %c384 = arith.constant 384 : index
    %12 = vector.load %arg4[%c0_7, %c384] : memref<1x480xf32, #tpu.memory_space<vmem>>, vector<1x32xf32>
    %13 = vector.broadcast %12 : vector<1x32xf32> to vector<16x32xf32>
    %14 = arith.addf %11, %13 : vector<16x32xf32>
    %15 = arith.addf %14, %0 : vector<16x32xf32>
    %c0_8 = arith.constant 0 : index
    %c416 = arith.constant 416 : index
    %16 = vector.load %arg4[%c0_8, %c416] : memref<1x480xf32, #tpu.memory_space<vmem>>, vector<1x32xf32>
    %c0_9 = arith.constant 0 : index
    %c448 = arith.constant 448 : index
    %17 = vector.load %arg4[%c0_9, %c448] : memref<1x480xf32, #tpu.memory_space<vmem>>, vector<1x32xf32>
    %cst_10 = arith.constant dense<0.000000e+00> : vector<16xf32>
    %18 = vector.multi_reduction <add>, %15, %cst_10 [1] : vector<16x32xf32> to vector<16xf32>
    %19 = vector.shape_cast %18 : vector<16xf32> to vector<16x1xf32>
    %cst_11 = arith.constant 3.200000e+01 : f32
    %20 = vector.broadcast %cst_11 : f32 to vector<16x1xf32>
    %21 = arith.divf %19, %20 : vector<16x1xf32>
    %22 = vector.broadcast %21 : vector<16x1xf32> to vector<16x32xf32>
    %23 = arith.subf %15, %22 : vector<16x32xf32>
    %24 = arith.mulf %23, %23 : vector<16x32xf32>
    %cst_12 = arith.constant dense<0.000000e+00> : vector<16xf32>
    %25 = vector.multi_reduction <add>, %24, %cst_12 [1] : vector<16x32xf32> to vector<16xf32>
    %26 = vector.shape_cast %25 : vector<16xf32> to vector<16x1xf32>
    %cst_13 = arith.constant 3.200000e+01 : f32
    %27 = vector.broadcast %cst_13 : f32 to vector<16x1xf32>
    %28 = arith.divf %26, %27 : vector<16x1xf32>
    %29 = vector.broadcast %21 : vector<16x1xf32> to vector<16x32xf32>
    %30 = arith.subf %15, %29 : vector<16x32xf32>
    %cst_14 = arith.constant 9.99999974E-6 : f32
    %31 = vector.broadcast %cst_14 : f32 to vector<16x1xf32>
    %32 = arith.addf %28, %31 : vector<16x1xf32>
    %33 = math.rsqrt %32 : vector<16x1xf32>
    %34 = vector.broadcast %33 : vector<16x1xf32> to vector<16x32xf32>
    %35 = arith.mulf %30, %34 : vector<16x32xf32>
    %36 = vector.broadcast %16 : vector<1x32xf32> to vector<16x32xf32>
    %37 = arith.mulf %35, %36 : vector<16x32xf32>
    %38 = vector.broadcast %17 : vector<1x32xf32> to vector<16x32xf32>
    %39 = arith.addf %37, %38 : vector<16x32xf32>
    %40 = arith.truncf %39 : vector<16x32xf32> to vector<16x32xbf16>
    %c0_15 = arith.constant 0 : index
    %c0_16 = arith.constant 0 : index
    %41 = vector.load %arg2[%c0_15, %c0_16] : memref<32x320xbf16, #tpu.memory_space<vmem>>, vector<32x96xbf16>
    %cst_17 = arith.constant dense<0.000000e+00> : vector<16x96xf32>
    %42 = tpu.matmul %40, %41, %cst_17 {dimension_numbers = #tpu.dot_dimension_numbers<[1], [0], [0], [1], [0, 0, 1, 1], [], []>} : vector<16x32xbf16>, vector<32x96xbf16>, vector<16x96xf32> -> vector<16x96xf32>
    %c0_18 = arith.constant 0 : index
    %c0_19 = arith.constant 0 : index
    %43 = vector.load %arg4[%c0_18, %c0_19] : memref<1x480xf32, #tpu.memory_space<vmem>>, vector<1x96xf32>
    %44 = vector.broadcast %43 : vector<1x96xf32> to vector<16x96xf32>
    %45 = arith.addf %42, %44 : vector<16x96xf32>
    %46 = arith.truncf %45 : vector<16x96xf32> to vector<16x96xbf16>
    %47 = vector.extract_strided_slice %46 {offsets = [0, 0], sizes = [16, 12], strides = [1, 1]} : vector<16x96xbf16> to vector<16x12xbf16>
    %48 = vector.extract_strided_slice %46 {offsets = [0, 12], sizes = [16, 12], strides = [1, 1]} : vector<16x96xbf16> to vector<16x12xbf16>
    %49 = vector.extract_strided_slice %46 {offsets = [0, 24], sizes = [16, 12], strides = [1, 1]} : vector<16x96xbf16> to vector<16x12xbf16>
    %50 = vector.extract_strided_slice %46 {offsets = [0, 36], sizes = [16, 12], strides = [1, 1]} : vector<16x96xbf16> to vector<16x12xbf16>
    %51 = vector.extract_strided_slice %46 {offsets = [0, 48], sizes = [16, 12], strides = [1, 1]} : vector<16x96xbf16> to vector<16x12xbf16>
    %52 = vector.extract_strided_slice %46 {offsets = [0, 60], sizes = [16, 12], strides = [1, 1]} : vector<16x96xbf16> to vector<16x12xbf16>
    %53 = vector.extract_strided_slice %46 {offsets = [0, 72], sizes = [16, 12], strides = [1, 1]} : vector<16x96xbf16> to vector<16x12xbf16>
    %54 = vector.extract_strided_slice %46 {offsets = [0, 84], sizes = [16, 12], strides = [1, 1]} : vector<16x96xbf16> to vector<16x12xbf16>
    %55 = vector.shape_cast %47 : vector<16x12xbf16> to vector<1x16x12xbf16>
    %56 = vector.shape_cast %48 : vector<16x12xbf16> to vector<1x16x12xbf16>
    %57 = vector.shape_cast %49 : vector<16x12xbf16> to vector<1x16x12xbf16>
    %58 = vector.shape_cast %50 : vector<16x12xbf16> to vector<1x16x12xbf16>
    %59 = vector.shape_cast %51 : vector<16x12xbf16> to vector<1x16x12xbf16>
    %60 = vector.shape_cast %52 : vector<16x12xbf16> to vector<1x16x12xbf16>
    %61 = vector.shape_cast %53 : vector<16x12xbf16> to vector<1x16x12xbf16>
    %62 = vector.shape_cast %54 : vector<16x12xbf16> to vector<1x16x12xbf16>
    %63 = tpu.concatenate %55, %56, %57, %58, %59, %60, %61, %62 in 0 : vector<1x16x12xbf16>, vector<1x16x12xbf16>, vector<1x16x12xbf16>, vector<1x16x12xbf16>, vector<1x16x12xbf16>, vector<1x16x12xbf16>, vector<1x16x12xbf16>, vector<1x16x12xbf16> -> vector<8x16x12xbf16>
    %64 = vector.shape_cast %63 : vector<8x16x12xbf16> to vector<16x8x12xbf16>
    %65 = vector.extract_strided_slice %64 {offsets = [0, 0, 0], sizes = [16, 8, 4], strides = [1, 1, 1]} : vector<16x8x12xbf16> to vector<16x8x4xbf16>
    %66 = vector.extract_strided_slice %64 {offsets = [0, 0, 4], sizes = [16, 8, 4], strides = [1, 1, 1]} : vector<16x8x12xbf16> to vector<16x8x4xbf16>
    %67 = vector.extract_strided_slice %64 {offsets = [0, 0, 8], sizes = [16, 8, 4], strides = [1, 1, 1]} : vector<16x8x12xbf16> to vector<16x8x4xbf16>
    "tpu.trace_start"() <{level = 10 : i32, message = "bqd,bkd->bqk"}> : () -> ()
    %cst_20 = arith.constant dense<0.000000e+00> : vector<16x8x8xf32>
    %68 = tpu.matmul %65, %66, %cst_20 {dimension_numbers = #tpu.dot_dimension_numbers<[2], [2], [1], [1], [0, 0, 0, 1, 1, 1], [0], [0]>} : vector<16x8x4xbf16>, vector<16x8x4xbf16>, vector<16x8x8xf32> -> vector<16x8x8xf32>
    "tpu.trace_stop"() : () -> ()
    %cst_21 = arith.constant dense<0xFF800000> : vector<16x8xf32>
    %69 = vector.multi_reduction <maximumf>, %68, %cst_21 [2] : vector<16x8x8xf32> to vector<16x8xf32>
    %70 = vector.shape_cast %69 : vector<16x8xf32> to vector<16x8x1xf32>
    %71 = vector.broadcast %70 : vector<16x8x1xf32> to vector<16x8x8xf32>
    %72 = arith.subf %68, %71 : vector<16x8x8xf32>
    %73 = math.exp %72 : vector<16x8x8xf32>
    %cst_22 = arith.constant dense<0.000000e+00> : vector<16x8xf32>
    %74 = vector.multi_reduction <add>, %73, %cst_22 [2] : vector<16x8x8xf32> to vector<16x8xf32>
    %75 = vector.shape_cast %74 : vector<16x8xf32> to vector<16x8x1xf32>
    %76 = tpu.reciprocal %75 {approx = true} : vector<16x8x1xf32> -> vector<16x8x1xf32>
    %77 = vector.broadcast %76 : vector<16x8x1xf32> to vector<16x8x8xf32>
    %78 = arith.mulf %73, %77 : vector<16x8x8xf32>
    %79 = arith.truncf %78 : vector<16x8x8xf32> to vector<16x8x8xbf16>
    "tpu.trace_start"() <{level = 10 : i32, message = "bqk,bkd->bqd"}> : () -> ()
    %cst_23 = arith.constant dense<0.000000e+00> : vector<16x8x4xf32>
    %80 = tpu.matmul %79, %67, %cst_23 {dimension_numbers = #tpu.dot_dimension_numbers<[2], [1], [1], [2], [0, 0, 0, 1, 1, 2], [0], [0]>} : vector<16x8x8xbf16>, vector<16x8x4xbf16>, vector<16x8x4xf32> -> vector<16x8x4xf32>
    "tpu.trace_stop"() : () -> ()
    %81 = arith.truncf %80 : vector<16x8x4xf32> to vector<16x8x4xbf16>
    %82 = vector.extract_strided_slice %81 {offsets = [0, 0, 0], sizes = [2, 8, 4], strides = [1, 1, 1]} : vector<16x8x4xbf16> to vector<2x8x4xbf16>
    %83 = vector.extract_strided_slice %81 {offsets = [2, 0, 0], sizes = [2, 8, 4], strides = [1, 1, 1]} : vector<16x8x4xbf16> to vector<2x8x4xbf16>
    %84 = vector.extract_strided_slice %81 {offsets = [4, 0, 0], sizes = [2, 8, 4], strides = [1, 1, 1]} : vector<16x8x4xbf16> to vector<2x8x4xbf16>
    %85 = vector.extract_strided_slice %81 {offsets = [6, 0, 0], sizes = [2, 8, 4], strides = [1, 1, 1]} : vector<16x8x4xbf16> to vector<2x8x4xbf16>
    %86 = vector.extract_strided_slice %81 {offsets = [8, 0, 0], sizes = [2, 8, 4], strides = [1, 1, 1]} : vector<16x8x4xbf16> to vector<2x8x4xbf16>
    %87 = vector.extract_strided_slice %81 {offsets = [10, 0, 0], sizes = [2, 8, 4], strides = [1, 1, 1]} : vector<16x8x4xbf16> to vector<2x8x4xbf16>
    %88 = vector.extract_strided_slice %81 {offsets = [12, 0, 0], sizes = [2, 8, 4], strides = [1, 1, 1]} : vector<16x8x4xbf16> to vector<2x8x4xbf16>
    %89 = vector.extract_strided_slice %81 {offsets = [14, 0, 0], sizes = [2, 8, 4], strides = [1, 1, 1]} : vector<16x8x4xbf16> to vector<2x8x4xbf16>
    %90 = tpu.concatenate %82, %83, %84, %85, %86, %87, %88, %89 in 2 : vector<2x8x4xbf16>, vector<2x8x4xbf16>, vector<2x8x4xbf16>, vector<2x8x4xbf16>, vector<2x8x4xbf16>, vector<2x8x4xbf16>, vector<2x8x4xbf16>, vector<2x8x4xbf16> -> vector<2x8x32xbf16>
    %91 = vector.shape_cast %90 : vector<2x8x32xbf16> to vector<16x32xbf16>
    %c0_24 = arith.constant 0 : index
    %c96 = arith.constant 96 : index
    %92 = vector.load %arg2[%c0_24, %c96] : memref<32x320xbf16, #tpu.memory_space<vmem>>, vector<32x32xbf16>
    %cst_25 = arith.constant dense<0.000000e+00> : vector<16x32xf32>
    %93 = tpu.matmul %91, %92, %cst_25 {dimension_numbers = #tpu.dot_dimension_numbers<[1], [0], [0], [1], [0, 0, 1, 1], [], []>} : vector<16x32xbf16>, vector<32x32xbf16>, vector<16x32xf32> -> vector<16x32xf32>
    %c0_26 = arith.constant 0 : index
    %c96_27 = arith.constant 96 : index
    %94 = vector.load %arg4[%c0_26, %c96_27] : memref<1x480xf32, #tpu.memory_space<vmem>>, vector<1x32xf32>
    %95 = vector.broadcast %94 : vector<1x32xf32> to vector<16x32xf32>
    %96 = arith.addf %93, %95 : vector<16x32xf32>
    %97 = arith.addf %39, %96 : vector<16x32xf32>
    %c0_28 = arith.constant 0 : index
    %c128 = arith.constant 128 : index
    %98 = vector.load %arg4[%c0_28, %c128] : memref<1x480xf32, #tpu.memory_space<vmem>>, vector<1x32xf32>
    %c0_29 = arith.constant 0 : index
    %c160 = arith.constant 160 : index
    %99 = vector.load %arg4[%c0_29, %c160] : memref<1x480xf32, #tpu.memory_space<vmem>>, vector<1x32xf32>
    %cst_30 = arith.constant dense<0.000000e+00> : vector<16xf32>
    %100 = vector.multi_reduction <add>, %97, %cst_30 [1] : vector<16x32xf32> to vector<16xf32>
    %101 = vector.shape_cast %100 : vector<16xf32> to vector<16x1xf32>
    %cst_31 = arith.constant 3.200000e+01 : f32
    %102 = vector.broadcast %cst_31 : f32 to vector<16x1xf32>
    %103 = arith.divf %101, %102 : vector<16x1xf32>
    %104 = vector.broadcast %103 : vector<16x1xf32> to vector<16x32xf32>
    %105 = arith.subf %97, %104 : vector<16x32xf32>
    %106 = arith.mulf %105, %105 : vector<16x32xf32>
    %cst_32 = arith.constant dense<0.000000e+00> : vector<16xf32>
    %107 = vector.multi_reduction <add>, %106, %cst_32 [1] : vector<16x32xf32> to vector<16xf32>
    %108 = vector.shape_cast %107 : vector<16xf32> to vector<16x1xf32>
    %cst_33 = arith.constant 3.200000e+01 : f32
    %109 = vector.broadcast %cst_33 : f32 to vector<16x1xf32>
    %110 = arith.divf %108, %109 : vector<16x1xf32>
    %111 = vector.broadcast %103 : vector<16x1xf32> to vector<16x32xf32>
    %112 = arith.subf %97, %111 : vector<16x32xf32>
    %cst_34 = arith.constant 9.99999974E-6 : f32
    %113 = vector.broadcast %cst_34 : f32 to vector<16x1xf32>
    %114 = arith.addf %110, %113 : vector<16x1xf32>
    %115 = math.rsqrt %114 : vector<16x1xf32>
    %116 = vector.broadcast %115 : vector<16x1xf32> to vector<16x32xf32>
    %117 = arith.mulf %112, %116 : vector<16x32xf32>
    %118 = vector.broadcast %98 : vector<1x32xf32> to vector<16x32xf32>
    %119 = arith.mulf %117, %118 : vector<16x32xf32>
    %120 = vector.broadcast %99 : vector<1x32xf32> to vector<16x32xf32>
    %121 = arith.addf %119, %120 : vector<16x32xf32>
    %122 = arith.truncf %121 : vector<16x32xf32> to vector<16x32xbf16>
    %c0_35 = arith.constant 0 : index
    %c128_36 = arith.constant 128 : index
    %123 = vector.load %arg2[%c0_35, %c128_36] : memref<32x320xbf16, #tpu.memory_space<vmem>>, vector<32x128xbf16>
    %cst_37 = arith.constant dense<0.000000e+00> : vector<16x128xf32>
    %124 = tpu.matmul %122, %123, %cst_37 {dimension_numbers = #tpu.dot_dimension_numbers<[1], [0], [0], [1], [0, 0, 1, 1], [], []>} : vector<16x32xbf16>, vector<32x128xbf16>, vector<16x128xf32> -> vector<16x128xf32>
    %c0_38 = arith.constant 0 : index
    %c192 = arith.constant 192 : index
    %125 = vector.load %arg4[%c0_38, %c192] : memref<1x480xf32, #tpu.memory_space<vmem>>, vector<1x128xf32>
    %126 = vector.broadcast %125 : vector<1x128xf32> to vector<16x128xf32>
    %127 = arith.addf %124, %126 : vector<16x128xf32>
    %128 = arith.truncf %127 : vector<16x128xf32> to vector<16x128xbf16>
    %c0_39 = arith.constant 0 : index
    %c0_40 = arith.constant 0 : index
    %129 = vector.load %arg5[%c0_39, %c0_40] : memref<16x128xbf16, #tpu.memory_space<vmem>>, vector<16x128xbf16>
    tpu.vector_store %arg5[%c0_39, %c0_40], %128 {strides = array<i32>} : memref<16x128xbf16, #tpu.memory_space<vmem>>, vector<16x128xbf16>,
    return
  }
  func.func @transform_0(%arg0: i32) -> (i32, i32) {
    %c0_i32 = arith.constant 0 : i32
    %c0_i32_0 = arith.constant 0 : i32
    %c0_i32_1 = arith.constant 0 : i32
    return %c0_i32, %c0_i32_0 : i32, i32
  }
  func.func @transform_1(%arg0: i32) -> (i32, i32) {
    %c0_i32 = arith.constant 0 : i32
    %c0_i32_0 = arith.constant 0 : i32
    %c0_i32_1 = arith.constant 0 : i32
    return %c0_i32, %c0_i32_0 : i32, i32
  }
  func.func @transform_2(%arg0: i32) -> (i32, i32) {
    %c0_i32 = arith.constant 0 : i32
    %c0_i32_0 = arith.constant 0 : i32
    %c0_i32_1 = arith.constant 0 : i32
    return %c0_i32, %c0_i32_0 : i32, i32
  }
  func.func @transform_3(%arg0: i32) -> (i32, i32) {
    %c0_i32 = arith.constant 0 : i32
    %c0_i32_0 = arith.constant 0 : i32
    %c0_i32_1 = arith.constant 0 : i32
    return %c0_i32, %c0_i32_0 : i32, i32
  }
  func.func @transform_4(%arg0: i32) -> (i32, i32) {
    %c0_i32 = arith.constant 0 : i32
    %c0_i32_0 = arith.constant 0 : i32
    %c0_i32_1 = arith.constant 0 : i32
    return %c0_i32, %c0_i32_0 : i32, i32
  }
}

</mosaic_0001>

<llo_original>
// kernel: tpu_custom_call.1
$region0: #{tpu_custom_call.1}
  #allocation0 [shape = 'u32[]', space=smem, size = 0x4, offset = 0x4, fixed_abs, tag = 'smem constant byte address 0x4 - core index']
  #allocation1 [shape = 'u32[144,128]{1,0:T(1,128)}', space=vmem, size = 0x12000, scoped, tag = 'internal scratch']
  %s0 = inlined_call_operand.hbm [shape: f32[16,32], index: 0, kind: input, shape index: {}]
  %s1 = inlined_call_operand.vmem [shape: bf16[32,320], index: 1, kind: input, shape index: {}]
  %s2 = inlined_call_operand.vmem [shape: bf16[64,32], index: 2, kind: input, shape index: {}]
  %s3 = inlined_call_operand.vmem [shape: f32[1,480], index: 3, kind: input, shape index: {}]
  %s4 = inlined_call_operand.hbm [shape: bf16[16,128], index: 4, kind: output, shape index: {}]
  %s5 = sld [smem:[#allocation0]]
  $region30: #{tpu_custom_call.1} parent=0
    _
  %s7 = ssub.s32 1, %s5
  %s8 = scalar_select 0, %s7, %s5
  $region1: #{tpu_custom_call.1} parent=0
    #allocation2 [shape = 'u8[8192]{0}', space=vmem, size = 0x2000, scoped, tag = 'input window, operand 0, single buffered']
    #allocation3 [shape = 's32[1]{0}', space=sflag, size = 0x4, scoped, tag = 'scoped memory for tpu_custom_call.1']
    #allocation4 [shape = 's32[1]{0}', space=sflag, size = 0x4, scoped, tag = 'scoped memory for tpu_custom_call.1']
    #allocation5 [shape = 'u8[4096]{0}', space=vmem, size = 0x1000, scoped, tag = 'output window, operand 0, single buffered']
    %9 = vsyncpa [#allocation3], 0
    %10 = vsyncpa [#allocation4], 0
    // Predicated region
    $region2: #{tpu_custom_call.1} parent=1 // pred_check
      _
    $region3: #{tpu_custom_call.1} parent=1 // pred_check_branch
      %12 = sbr.rel (0) target = $region5
    $region4: #{tpu_custom_call.1} parent=1 // pred_region
      %s14 = ssub.s32 256, 256
      %15 = vsyncadd [#allocation3], %s14
      %s16 = sshll.u32 [#allocation2], 4
      %s17 = int_to_ptr.vmem [resolvable:$true] %s16
      %22 = dma.hbm_to_vmem [thread:$0]  %s0, 256, %s17, [#allocation3], 128, 128, 8
    $region5: #{tpu_custom_call.1} parent=1 // pred_fallthru
      _
    // Predicated region
    $region6: #{tpu_custom_call.1} parent=1 // pred_check
      _
    $region7: #{tpu_custom_call.1} parent=1 // pred_check_branch
      %24 = sbr.rel (0) target = $region9
    $region8: #{tpu_custom_call.1} parent=1 // pred_region
      _
    $region9: #{tpu_custom_call.1} parent=1 // pred_fallthru
      _
    // Predicated region
    $region10: #{tpu_custom_call.1} parent=1 // pred_check
      _
    $region11: #{tpu_custom_call.1} parent=1 // pred_check_branch
      %26 = sbr.rel (0) target = $region13
    $region12: #{tpu_custom_call.1} parent=1 // pred_region
      _
    $region13: #{tpu_custom_call.1} parent=1 // pred_fallthru
      _
    // Predicated region
    $region14: #{tpu_custom_call.1} parent=1 // pred_check
      _
    $region15: #{tpu_custom_call.1} parent=1 // pred_check_branch
      %28 = sbr.rel (0) target = $region17
    $region16: #{tpu_custom_call.1} parent=1 // pred_region
      _
    $region17: #{tpu_custom_call.1} parent=1 // pred_fallthru
      _
    // Predicated region
    $region18: #{tpu_custom_call.1} parent=1 // pred_check
      _
    $region19: #{tpu_custom_call.1} parent=1 // pred_check_branch
      %30 = sbr.rel (0) target = $region21
    $region20: #{tpu_custom_call.1} parent=1 // pred_region
      %31 = dma.done [#allocation3], 256
    $region21: #{tpu_custom_call.1} parent=1 // pred_fallthru
      _
    %v33 = vld [vmem:[#allocation2] sm:$0xff]
    %v34 = vld [vmem:[#allocation2 + $0x8] sm:$0xff]
    %v35 = vpack.c.bf16 %v34, %v33
    %v36 = vld [vmem:[%s1 + $0x8] sm:$0xf]
    %v37 = vld [vmem:[%s1 + $0x14] sm:$0xf]
    %v38 = vld [vmem:[%s1 + $0x20] sm:$0xf]
    %v39 = vld [vmem:[%s1 + $0x2c] sm:$0xf]
    %v40 = vld [vmem:[%s3 + $0x2] sm:$0x1]
    %v42 = vlaneseq
    %v43 = vshrl.u32 %v42, 7
    %v44 = vsub.s32 0, %v43
    %v45 = vrot.slane %v40, %v44
    %v50 = vunpack.c.l.b16 %v36
    %v51 = vunpack.c.l.b16 %v37
    %v52 = vunpack.c.l.b16 %v38
    %v53 = vunpack.c.l.b16 %v39
    %v54 = vpack.c.b16 %v51, %v50
    %v55 = vpack.c.b16 %v53, %v52
    %58 = vrot.lane.b32.xlu0 %v45, 64
    %v59 = vpop.permute.xlu0 %58
    %vm61 = vcmask 261120
    %v63 = vsel %vm61, %v35, 0
    %65 = vmatprep.subr.bf16.mxu0 0
    %66 = vmatpush1.bf16.msra.mxu0 %v54
    %67 = vmatprep.subr.bf16.mxu0 0
    %68 = vmatpush1.bf16.msra.mxu0 %v55
    %69 = vmatprep.subr.bf16.mxu0 0
    %70 = vmatpush1.bf16.msra.mxu0 0
    %71 = vmatprep.subr.bf16.mxu0 0
    %72 = vmatpush1.bf16.msra.mxu0 0
    %73 = vmatprep.subr.bf16.mxu0 0
    %74 = vmatpush1.bf16.msra.mxu0 0
    %75 = vmatprep.subr.bf16.mxu0 0
    %76 = vmatpush1.bf16.msra.mxu0 0
    %77 = vmatprep.subr.bf16.mxu0 0
    %78 = vmatpush1.bf16.msra.mxu0 0
    %79 = vmatprep.subr.bf16.mxu0 0
    %80 = vmatpush1.bf16.msra.mxu0 0
    %81 = vmatprep.subr.bf16.mxu0 0
    %82 = vmatpush1.bf16.msra.mxu0 0
    %83 = vmatprep.subr.bf16.mxu0 0
    %84 = vmatpush1.bf16.msra.mxu0 0
    %85 = vmatprep.subr.bf16.mxu0 0
    %86 = vmatpush1.bf16.msra.mxu0 0
    %87 = vmatprep.subr.bf16.mxu0 0
    %88 = vmatpush1.bf16.msra.mxu0 0
    %89 = vmatprep.subr.bf16.mxu0 0
    %90 = vmatpush1.bf16.msra.mxu0 0
    %91 = vmatprep.subr.bf16.mxu0 0
    %92 = vmatpush1.bf16.msra.mxu0 0
    %93 = vmatprep.subr.bf16.mxu0 0
    %94 = vmatpush1.bf16.msra.mxu0 0
    %95 = vmatprep.subr.bf16.mxu0 0
    %96 = vmatpush1.bf16.msra.mxu0 0
    %97 = vmatprep.mubr.bf16.mxu0 0
    %98 = vmatmul.mubr.bf16.gmra.mrb[0].mxu0 %v63
    %v99 = vpop.f32.mrb[0].mxu0
    %v100 = vadd.f32 %v59, %v99
    %v101 = vpop.f32.mrb[0].mxu0
    %v102 = vpop.f32.mrb[0].mxu0
    %v103 = vadd.f32 %v59, %v102
    %v104 = vpop.f32.mrb[0].mxu0
    %105 = vdwg.mxu0
    %v106 = vmax.f32 %v100, 0.0
    %v107 = vmax.f32 %v103, 0.0
    %v108 = vpack.c.bf16 %v107, %v106
    %v109 = vld [vmem:[%s2] sm:$0xf]
    %v110 = vld [vmem:[%s2 + $0x4] sm:$0xf]
    %v111 = vld [vmem:[%s2 + $0x8] sm:$0xf]
    %v112 = vld [vmem:[%s2 + $0xc] sm:$0xf]
    %v113 = vld [vmem:[%s2 + $0x10] sm:$0xf]
    %v114 = vld [vmem:[%s2 + $0x14] sm:$0xf]
    %v115 = vld [vmem:[%s2 + $0x18] sm:$0xf]
    %v116 = vld [vmem:[%s2 + $0x1c] sm:$0xf]
    %v117 = vld [vmem:[%s3 + $0x3] sm:$0x1]
    %v119 = vlaneseq
    %v120 = vshrl.u32 %v119, 7
    %v121 = vsub.s32 0, %v120
    %v122 = vrot.slane %v117, %v121
    %v132 = vunpack.c.l.b16 %v109
    %v133 = vunpack.c.l.b16 %v110
    %v134 = vunpack.c.l.b16 %v111
    %v135 = vunpack.c.l.b16 %v112
    %v136 = vunpack.c.l.b16 %v113
    %v137 = vunpack.c.l.b16 %v114
    %v138 = vunpack.c.l.b16 %v115
    %v139 = vunpack.c.l.b16 %v116
    %v140 = vpack.c.b16 %v133, %v132
    %v141 = vpack.c.b16 %v135, %v134
    %v142 = vpack.c.b16 %v137, %v136
    %v143 = vpack.c.b16 %v139, %v138
    %vm148 = vcmask 523264
    %v150 = vsel %vm148, %v108, 0
    %152 = vmatprep.subr.bf16.mxu0 0
    %153 = vmatpush1.bf16.msra.mxu0 %v140
    %154 = vmatprep.subr.bf16.mxu0 0
    %155 = vmatpush1.bf16.msra.mxu0 %v141
    %156 = vmatprep.subr.bf16.mxu0 0
    %157 = vmatpush1.bf16.msra.mxu0 %v142
    %158 = vmatprep.subr.bf16.mxu0 0
    %159 = vmatpush1.bf16.msra.mxu0 %v143
    %160 = vmatprep.subr.bf16.mxu0 0
    %161 = vmatpush1.bf16.msra.mxu0 0
    %162 = vmatprep.subr.bf16.mxu0 0
    %163 = vmatpush1.bf16.msra.mxu0 0
    %164 = vmatprep.subr.bf16.mxu0 0
    %165 = vmatpush1.bf16.msra.mxu0 0
    %166 = vmatprep.subr.bf16.mxu0 0
    %167 = vmatpush1.bf16.msra.mxu0 0
    %168 = vmatprep.subr.bf16.mxu0 0
    %169 = vmatpush1.bf16.msra.mxu0 0
    %170 = vmatprep.subr.bf16.mxu0 0
    %171 = vmatpush1.bf16.msra.mxu0 0
    %172 = vmatprep.subr.bf16.mxu0 0
    %173 = vmatpush1.bf16.msra.mxu0 0
    %174 = vmatprep.subr.bf16.mxu0 0
    %175 = vmatpush1.bf16.msra.mxu0 0
    %176 = vmatprep.subr.bf16.mxu0 0
    %177 = vmatpush1.bf16.msra.mxu0 0
    %178 = vmatprep.subr.bf16.mxu0 0
    %179 = vmatpush1.bf16.msra.mxu0 0
    %180 = vmatprep.subr.bf16.mxu0 0
    %181 = vmatpush1.bf16.msra.mxu0 0
    %182 = vmatprep.subr.bf16.mxu0 0
    %183 = vmatpush1.bf16.msra.mxu0 0
    %184 = vmatprep.mubr.bf16.mxu0 0
    %185 = vmatmul.mubr.bf16.gmra.mrb[0].mxu0 %v150
    %v186 = vpop.f32.mrb[0].mxu0
    %v187 = vadd.f32 %v122, %v186
    %v188 = vpop.f32.mrb[0].mxu0
    %v189 = vpop.f32.mrb[0].mxu0
    %v190 = vadd.f32 %v122, %v189
    %v191 = vpop.f32.mrb[0].mxu0
    %192 = vdwg.mxu0
    %v193 = vadd.f32 %v187, %v33
    %v194 = vadd.f32 %v190, %v34
    %v195 = vsel %vm61, %v193, 0.0
    %196 = vadd.xlane.f32.xlu0 %v195
    %v197 = vpop.xlane.xlu0 %196
    %v198 = vsel %vm61, %v194, 0.0
    %199 = vadd.xlane.f32.xlu0 %v198
    %v200 = vpop.xlane.xlu0 %199
    %v201 = vrcp.pop 32.0
    %v202 = vmul.f32 %v197, %v201
    %v203 = vmul.f32 %v200, %v201
    %v204 = vsub.f32 %v193, %v202
    %v205 = vsub.f32 %v194, %v203
    %v206 = vmul.f32 %v204, %v204
    %v207 = vmul.f32 %v205, %v205
    %v208 = vsel %vm61, %v206, 0.0
    %209 = vadd.xlane.f32.xlu0 %v208
    %v210 = vpop.xlane.xlu0 %209
    %v211 = vsel %vm61, %v207, 0.0
    %212 = vadd.xlane.f32.xlu0 %v211
    %v213 = vpop.xlane.xlu0 %212
    %v214 = vmul.f32 %v210, %v201
    %v215 = vmul.f32 %v213, %v201
    %v216 = vadd.f32 %v214, 1e-05
    %v217 = vadd.f32 %v215, 1e-05
    %v218 = vrsqrt.pop %v216
    %v219 = vrsqrt.pop %v217
    %v220 = vmul.f32 %v204, %v218
    %v221 = vmul.f32 %v205, %v219
    %222 = vrot.lane.b32.xlu0 %v122, 96
    %v223 = vpop.permute.xlu0 %222
    %v225 = vmul.f32 %v220, %v223
    %v226 = vmul.f32 %v221, %v223
    %227 = vrot.lane.b32.xlu0 %v122, 64
    %v228 = vpop.permute.xlu0 %227
    %v230 = vadd.f32 %v225, %v228
    %v231 = vadd.f32 %v226, %v228
    %v232 = vpack.c.bf16 %v231, %v230
    %v233 = vld [vmem:[%s1] sm:$0xf]
    %v234 = vld [vmem:[%s1 + $0xc] sm:$0xf]
    %v235 = vld [vmem:[%s1 + $0x18] sm:$0xf]
    %v236 = vld [vmem:[%s1 + $0x24] sm:$0xf]
    %v237 = vld [vmem:[%s3] sm:$0x1]
    %v239 = vlaneseq
    %v240 = vshrl.u32 %v239, 7
    %v241 = vsub.s32 0, %v240
    %v242 = vrot.slane %v237, %v241
    %v248 = vunpack.c.l.b16 %v233
    %v249 = vunpack.c.l.b16 %v234
    %v250 = vunpack.c.l.b16 %v235
    %v251 = vunpack.c.l.b16 %v236
    %v252 = vpack.c.b16 %v249, %v248
    %v253 = vpack.c.b16 %v251, %v250
    %v257 = vsel %vm61, %v232, 0
    %259 = vmatprep.subr.bf16.mxu0 0
    %260 = vmatpush1.bf16.msra.mxu0 %v252
    %261 = vmatprep.subr.bf16.mxu0 0
    %262 = vmatpush1.bf16.msra.mxu0 %v253
    %263 = vmatprep.subr.bf16.mxu0 0
    %264 = vmatpush1.bf16.msra.mxu0 0
    %265 = vmatprep.subr.bf16.mxu0 0
    %266 = vmatpush1.bf16.msra.mxu0 0
    %267 = vmatprep.subr.bf16.mxu0 0
    %268 = vmatpush1.bf16.msra.mxu0 0
    %269 = vmatprep.subr.bf16.mxu0 0
    %270 = vmatpush1.bf16.msra.mxu0 0
    %271 = vmatprep.subr.bf16.mxu0 0
    %272 = vmatpush1.bf16.msra.mxu0 0
    %273 = vmatprep.subr.bf16.mxu0 0
    %274 = vmatpush1.bf16.msra.mxu0 0
    %275 = vmatprep.subr.bf16.mxu0 0
    %276 = vmatpush1.bf16.msra.mxu0 0
    %277 = vmatprep.subr.bf16.mxu0 0
    %278 = vmatpush1.bf16.msra.mxu0 0
    %279 = vmatprep.subr.bf16.mxu0 0
    %280 = vmatpush1.bf16.msra.mxu0 0
    %281 = vmatprep.subr.bf16.mxu0 0
    %282 = vmatpush1.bf16.msra.mxu0 0
    %283 = vmatprep.subr.bf16.mxu0 0
    %284 = vmatpush1.bf16.msra.mxu0 0
    %285 = vmatprep.subr.bf16.mxu0 0
    %286 = vmatpush1.bf16.msra.mxu0 0
    %287 = vmatprep.subr.bf16.mxu0 0
    %288 = vmatpush1.bf16.msra.mxu0 0
    %289 = vmatprep.subr.bf16.mxu0 0
    %290 = vmatpush1.bf16.msra.mxu0 0
    %291 = vmatprep.mubr.bf16.mxu0 0
    %292 = vmatmul.mubr.bf16.gmra.mrb[0].mxu0 %v257
    %v293 = vpop.f32.mrb[0].mxu0
    %v294 = vadd.f32 %v242, %v293
    %v295 = vpop.f32.mrb[0].mxu0
    %v296 = vpop.f32.mrb[0].mxu0
    %v297 = vadd.f32 %v242, %v296
    %v298 = vpop.f32.mrb[0].mxu0
    %299 = vdwg.mxu0
    %v300 = vpack.c.bf16 %v297, %v294
    %302 = vrot.lane.b32.xlu0 %v300, 116
    %v303 = vpop.permute.xlu0 %302
    %304 = vrot.lane.b32.xlu0 %v300, 104
    %v305 = vpop.permute.xlu0 %304
    %306 = vrot.lane.b32.xlu0 %v300, 92
    %v307 = vpop.permute.xlu0 %306
    %308 = vrot.lane.b32.xlu0 %v300, 80
    %v309 = vpop.permute.xlu0 %308
    %310 = vrot.lane.b32.xlu0 %v300, 68
    %v311 = vpop.permute.xlu0 %310
    %312 = vrot.lane.b32.xlu0 %v300, 56
    %v313 = vpop.permute.xlu0 %312
    %314 = vrot.lane.b32.xlu0 %v300, 44
    %v315 = vpop.permute.xlu0 %314
    %v316 = vunpack.c.l.b16 %v300
    %v317 = vunpack.c.h.b16 %v300
    %v318 = vunpack.c.l.b16 %v303
    %v319 = vunpack.c.h.b16 %v303
    %v320 = vunpack.c.l.b16 %v305
    %v321 = vunpack.c.h.b16 %v305
    %v322 = vunpack.c.l.b16 %v307
    %v323 = vunpack.c.h.b16 %v307
    %v324 = vunpack.c.l.b16 %v309
    %v325 = vunpack.c.h.b16 %v309
    %v326 = vunpack.c.l.b16 %v311
    %v327 = vunpack.c.h.b16 %v311
    %v328 = vunpack.c.l.b16 %v313
    %v329 = vunpack.c.h.b16 %v313
    %v330 = vunpack.c.l.b16 %v315
    %v331 = vunpack.c.h.b16 %v315
    %v332 = vpack.c.b16 %v316, %v316
    %v333 = vpack.c.b16 %v317, %v317
    %v334 = vpack.c.b16 %v318, %v318
    %v335 = vpack.c.b16 %v319, %v319
    %v336 = vpack.c.b16 %v320, %v320
    %v337 = vpack.c.b16 %v321, %v321
    %v338 = vpack.c.b16 %v322, %v322
    %v339 = vpack.c.b16 %v323, %v323
    %v340 = vpack.c.b16 %v324, %v324
    %v341 = vpack.c.b16 %v325, %v325
    %v342 = vpack.c.b16 %v326, %v326
    %v343 = vpack.c.b16 %v327, %v327
    %v344 = vpack.c.b16 %v328, %v328
    %v345 = vpack.c.b16 %v329, %v329
    %v346 = vpack.c.b16 %v330, %v330
    %v347 = vpack.c.b16 %v331, %v331
    %348 = vrot.lane.b32.xlu0 %v332, 124
    %v349 = vpop.permute.xlu0 %348
    %vm350 = vcmask 31744
    %v352 = vsel %vm350, %v332, 0
    %v355 = vsel %vm350, %v349, 0
    %357 = vmatprep.subr.bf16.mxu0 0
    %358 = vmatpush1.bf16.xpose.msra.mxu0 %v355
    %359 = vmatprep.subr.bf16.mxu0 0
    %360 = vmatpush1.bf16.xpose.msra.mxu0 0
    %361 = vmatprep.subr.bf16.mxu0 0
    %362 = vmatpush1.bf16.xpose.msra.mxu0 0
    %363 = vmatprep.subr.bf16.mxu0 0
    %364 = vmatpush1.bf16.xpose.msra.mxu0 0
    %365 = vmatprep.subr.bf16.mxu0 0
    %366 = vmatpush1.bf16.xpose.msra.mxu0 0
    %367 = vmatprep.subr.bf16.mxu0 0
    %368 = vmatpush1.bf16.xpose.msra.mxu0 0
    %369 = vmatprep.subr.bf16.mxu0 0
    %370 = vmatpush1.bf16.xpose.msra.mxu0 0
    %371 = vmatprep.subr.bf16.mxu0 0
    %372 = vmatpush1.bf16.xpose.msra.mxu0 0
    %373 = vmatprep.subr.bf16.mxu0 0
    %374 = vmatpush1.bf16.xpose.msra.mxu0 0
    %375 = vmatprep.subr.bf16.mxu0 0
    %376 = vmatpush1.bf16.xpose.msra.mxu0 0
    %377 = vmatprep.subr.bf16.mxu0 0
    %378 = vmatpush1.bf16.xpose.msra.mxu0 0
    %379 = vmatprep.subr.bf16.mxu0 0
    %380 = vmatpush1.bf16.xpose.msra.mxu0 0
    %381 = vmatprep.subr.bf16.mxu0 0
    %382 = vmatpush1.bf16.xpose.msra.mxu0 0
    %383 = vmatprep.subr.bf16.mxu0 0
    %384 = vmatpush1.bf16.xpose.msra.mxu0 0
    %385 = vmatprep.subr.bf16.mxu0 0
    %386 = vmatpush1.bf16.xpose.msra.mxu0 0
    %387 = vmatprep.subr.bf16.mxu0 0
    %388 = vmatpush1.bf16.xpose.msra.mxu0 0
    %389 = vmatprep.mubr.bf16.mxu0 0
    %390 = vmatmul.mubr.bf16.gmra.mrb[0].mxu0 %v352
    %v391 = vpop.f32.mrb[0].mxu0
    %v392 = vadd.f32 0.0, %v391
    %v393 = vpop.f32.mrb[0].mxu0
    %v394 = vpop.f32.mrb[0].mxu0
    %v395 = vpop.f32.mrb[0].mxu0
    %396 = vdwg.mxu0
    %397 = vrot.lane.b32.xlu0 %v333, 124
    %v398 = vpop.permute.xlu0 %397
    %v400 = vsel %vm350, %v333, 0
    %v403 = vsel %vm350, %v398, 0
    %405 = vmatprep.subr.bf16.mxu0 0
    %406 = vmatpush1.bf16.xpose.msra.mxu0 %v403
    %407 = vmatprep.subr.bf16.mxu0 0
    %408 = vmatpush1.bf16.xpose.msra.mxu0 0
    %409 = vmatprep.subr.bf16.mxu0 0
    %410 = vmatpush1.bf16.xpose.msra.mxu0 0
    %411 = vmatprep.subr.bf16.mxu0 0
    %412 = vmatpush1.bf16.xpose.msra.mxu0 0
    %413 = vmatprep.subr.bf16.mxu0 0
    %414 = vmatpush1.bf16.xpose.msra.mxu0 0
    %415 = vmatprep.subr.bf16.mxu0 0
    %416 = vmatpush1.bf16.xpose.msra.mxu0 0
    %417 = vmatprep.subr.bf16.mxu0 0
    %418 = vmatpush1.bf16.xpose.msra.mxu0 0
    %419 = vmatprep.subr.bf16.mxu0 0
    %420 = vmatpush1.bf16.xpose.msra.mxu0 0
    %421 = vmatprep.subr.bf16.mxu0 0
    %422 = vmatpush1.bf16.xpose.msra.mxu0 0
    %423 = vmatprep.subr.bf16.mxu0 0
    %424 = vmatpush1.bf16.xpose.msra.mxu0 0
    %425 = vmatprep.subr.bf16.mxu0 0
    %426 = vmatpush1.bf16.xpose.msra.mxu0 0
    %427 = vmatprep.subr.bf16.mxu0 0
    %428 = vmatpush1.bf16.xpose.msra.mxu0 0
    %429 = vmatprep.subr.bf16.mxu0 0
    %430 = vmatpush1.bf16.xpose.msra.mxu0 0
    %431 = vmatprep.subr.bf16.mxu0 0
    %432 = vmatpush1.bf16.xpose.msra.mxu0 0
    %433 = vmatprep.subr.bf16.mxu0 0
    %434 = vmatpush1.bf16.xpose.msra.mxu0 0
    %435 = vmatprep.subr.bf16.mxu0 0
    %436 = vmatpush1.bf16.xpose.msra.mxu0 0
    %437 = vmatprep.mubr.bf16.mxu0 0
    %438 = vmatmul.mubr.bf16.gmra.mrb[0].mxu0 %v400
    %v439 = vpop.f32.mrb[0].mxu0
    %v440 = vadd.f32 0.0, %v439
    %v441 = vpop.f32.mrb[0].mxu0
    %v442 = vpop.f32.mrb[0].mxu0
    %v443 = vpop.f32.mrb[0].mxu0
    %444 = vdwg.mxu0
    %445 = vrot.lane.b32.xlu0 %v334, 124
    %v446 = vpop.permute.xlu0 %445
    %v448 = vsel %vm350, %v334, 0
    %v451 = vsel %vm350, %v446, 0
    %453 = vmatprep.subr.bf16.mxu0 0
    %454 = vmatpush1.bf16.xpose.msra.mxu0 %v451
    %455 = vmatprep.subr.bf16.mxu0 0
    %456 = vmatpush1.bf16.xpose.msra.mxu0 0
    %457 = vmatprep.subr.bf16.mxu0 0
    %458 = vmatpush1.bf16.xpose.msra.mxu0 0
    %459 = vmatprep.subr.bf16.mxu0 0
    %460 = vmatpush1.bf16.xpose.msra.mxu0 0
    %461 = vmatprep.subr.bf16.mxu0 0
    %462 = vmatpush1.bf16.xpose.msra.mxu0 0
    %463 = vmatprep.subr.bf16.mxu0 0
    %464 = vmatpush1.bf16.xpose.msra.mxu0 0
    %465 = vmatprep.subr.bf16.mxu0 0
    %466 = vmatpush1.bf16.xpose.msra.mxu0 0
    %467 = vmatprep.subr.bf16.mxu0 0
    %468 = vmatpush1.bf16.xpose.msra.mxu0 0
    %469 = vmatprep.subr.bf16.mxu0 0
    %470 = vmatpush1.bf16.xpose.msra.mxu0 0
    %471 = vmatprep.subr.bf16.mxu0 0
    %472 = vmatpush1.bf16.xpose.msra.mxu0 0
    %473 = vmatprep.subr.bf16.mxu0 0
    %474 = vmatpush1.bf16.xpose.msra.mxu0 0
    %475 = vmatprep.subr.bf16.mxu0 0
    %476 = vmatpush1.bf16.xpose.msra.mxu0 0
    %477 = vmatprep.subr.bf16.mxu0 0
    %478 = vmatpush1.bf16.xpose.msra.mxu0 0
    %479 = vmatprep.subr.bf16.mxu0 0
    %480 = vmatpush1.bf16.xpose.msra.mxu0 0
    %481 = vmatprep.subr.bf16.mxu0 0
    %482 = vmatpush1.bf16.xpose.msra.mxu0 0
    %483 = vmatprep.subr.bf16.mxu0 0
    %484 = vmatpush1.bf16.xpose.msra.mxu0 0
    %485 = vmatprep.mubr.bf16.mxu0 0
    %486 = vmatmul.mubr.bf16.gmra.mrb[0].mxu0 %v448
    %v487 = vpop.f32.mrb[0].mxu0
    %v488 = vadd.f32 0.0, %v487
    %v489 = vpop.f32.mrb[0].mxu0
    %v490 = vpop.f32.mrb[0].mxu0
    %v491 = vpop.f32.mrb[0].mxu0
    %492 = vdwg.mxu0
    %493 = vrot.lane.b32.xlu0 %v335, 124
    %v494 = vpop.permute.xlu0 %493
    %v496 = vsel %vm350, %v335, 0
    %v499 = vsel %vm350, %v494, 0
    %501 = vmatprep.subr.bf16.mxu0 0
    %502 = vmatpush1.bf16.xpose.msra.mxu0 %v499
    %503 = vmatprep.subr.bf16.mxu0 0
    %504 = vmatpush1.bf16.xpose.msra.mxu0 0
    %505 = vmatprep.subr.bf16.mxu0 0
    %506 = vmatpush1.bf16.xpose.msra.mxu0 0
    %507 = vmatprep.subr.bf16.mxu0 0
    %508 = vmatpush1.bf16.xpose.msra.mxu0 0
    %509 = vmatprep.subr.bf16.mxu0 0
    %510 = vmatpush1.bf16.xpose.msra.mxu0 0
    %511 = vmatprep.subr.bf16.mxu0 0
    %512 = vmatpush1.bf16.xpose.msra.mxu0 0
    %513 = vmatprep.subr.bf16.mxu0 0
    %514 = vmatpush1.bf16.xpose.msra.mxu0 0
    %515 = vmatprep.subr.bf16.mxu0 0
    %516 = vmatpush1.bf16.xpose.msra.mxu0 0
    %517 = vmatprep.subr.bf16.mxu0 0
    %518 = vmatpush1.bf16.xpose.msra.mxu0 0
    %519 = vmatprep.subr.bf16.mxu0 0
    %520 = vmatpush1.bf16.xpose.msra.mxu0 0
    %521 = vmatprep.subr.bf16.mxu0 0
    %522 = vmatpush1.bf16.xpose.msra.mxu0 0
    %523 = vmatprep.subr.bf16.mxu0 0
    %524 = vmatpush1.bf16.xpose.msra.mxu0 0
    %525 = vmatprep.subr.bf16.mxu0 0
    %526 = vmatpush1.bf16.xpose.msra.mxu0 0
    %527 = vmatprep.subr.bf16.mxu0 0
    %528 = vmatpush1.bf16.xpose.msra.mxu0 0
    %529 = vmatprep.subr.bf16.mxu0 0
    %530 = vmatpush1.bf16.xpose.msra.mxu0 0
    %531 = vmatprep.subr.bf16.mxu0 0
    %532 = vmatpush1.bf16.xpose.msra.mxu0 0
    %533 = vmatprep.mubr.bf16.mxu0 0
    %534 = vmatmul.mubr.bf16.gmra.mrb[0].mxu0 %v496
    %v535 = vpop.f32.mrb[0].mxu0
    %v536 = vadd.f32 0.0, %v535
    %v537 = vpop.f32.mrb[0].mxu0
    %v538 = vpop.f32.mrb[0].mxu0
    %v539 = vpop.f32.mrb[0].mxu0
    %540 = vdwg.mxu0
    %541 = vrot.lane.b32.xlu0 %v336, 124
    %v542 = vpop.permute.xlu0 %541
    %v544 = vsel %vm350, %v336, 0
    %v547 = vsel %vm350, %v542, 0
    %549 = vmatprep.subr.bf16.mxu0 0
    %550 = vmatpush1.bf16.xpose.msra.mxu0 %v547
    %551 = vmatprep.subr.bf16.mxu0 0
    %552 = vmatpush1.bf16.xpose.msra.mxu0 0
    %553 = vmatprep.subr.bf16.mxu0 0
    %554 = vmatpush1.bf16.xpose.msra.mxu0 0
    %555 = vmatprep.subr.bf16.mxu0 0
    %556 = vmatpush1.bf16.xpose.msra.mxu0 0
    %557 = vmatprep.subr.bf16.mxu0 0
    %558 = vmatpush1.bf16.xpose.msra.mxu0 0
    %559 = vmatprep.subr.bf16.mxu0 0
    %560 = vmatpush1.bf16.xpose.msra.mxu0 0
    %561 = vmatprep.subr.bf16.mxu0 0
    %562 = vmatpush1.bf16.xpose.msra.mxu0 0
    %563 = vmatprep.subr.bf16.mxu0 0
    %564 = vmatpush1.bf16.xpose.msra.mxu0 0
    %565 = vmatprep.subr.bf16.mxu0 0
    %566 = vmatpush1.bf16.xpose.msra.mxu0 0
    %567 = vmatprep.subr.bf16.mxu0 0
    %568 = vmatpush1.bf16.xpose.msra.mxu0 0
    %569 = vmatprep.subr.bf16.mxu0 0
    %570 = vmatpush1.bf16.xpose.msra.mxu0 0
    %571 = vmatprep.subr.bf16.mxu0 0
    %572 = vmatpush1.bf16.xpose.msra.mxu0 0
    %573 = vmatprep.subr.bf16.mxu0 0
    %574 = vmatpush1.bf16.xpose.msra.mxu0 0
    %575 = vmatprep.subr.bf16.mxu0 0
    %576 = vmatpush1.bf16.xpose.msra.mxu0 0
    %577 = vmatprep.subr.bf16.mxu0 0
    %578 = vmatpush1.bf16.xpose.msra.mxu0 0
    %579 = vmatprep.subr.bf16.mxu0 0
    %580 = vmatpush1.bf16.xpose.msra.mxu0 0
    %581 = vmatprep.mubr.bf16.mxu0 0
    %582 = vmatmul.mubr.bf16.gmra.mrb[0].mxu0 %v544
    %v583 = vpop.f32.mrb[0].mxu0
    %v584 = vadd.f32 0.0, %v583
    %v585 = vpop.f32.mrb[0].mxu0
    %v586 = vpop.f32.mrb[0].mxu0
    %v587 = vpop.f32.mrb[0].mxu0
    %588 = vdwg.mxu0
    %589 = vrot.lane.b32.xlu0 %v337, 124
    %v590 = vpop.permute.xlu0 %589
    %v592 = vsel %vm350, %v337, 0
    %v595 = vsel %vm350, %v590, 0
    %597 = vmatprep.subr.bf16.mxu0 0
    %598 = vmatpush1.bf16.xpose.msra.mxu0 %v595
    %599 = vmatprep.subr.bf16.mxu0 0
    %600 = vmatpush1.bf16.xpose.msra.mxu0 0
    %601 = vmatprep.subr.bf16.mxu0 0
    %602 = vmatpush1.bf16.xpose.msra.mxu0 0
    %603 = vmatprep.subr.bf16.mxu0 0
    %604 = vmatpush1.bf16.xpose.msra.mxu0 0
    %605 = vmatprep.subr.bf16.mxu0 0
    %606 = vmatpush1.bf16.xpose.msra.mxu0 0
    %607 = vmatprep.subr.bf16.mxu0 0
    %608 = vmatpush1.bf16.xpose.msra.mxu0 0
    %609 = vmatprep.subr.bf16.mxu0 0
    %610 = vmatpush1.bf16.xpose.msra.mxu0 0
    %611 = vmatprep.subr.bf16.mxu0 0
    %612 = vmatpush1.bf16.xpose.msra.mxu0 0
    %613 = vmatprep.subr.bf16.mxu0 0
    %614 = vmatpush1.bf16.xpose.msra.mxu0 0
    %615 = vmatprep.subr.bf16.mxu0 0
    %616 = vmatpush1.bf16.xpose.msra.mxu0 0
    %617 = vmatprep.subr.bf16.mxu0 0
    %618 = vmatpush1.bf16.xpose.msra.mxu0 0
    %619 = vmatprep.subr.bf16.mxu0 0
    %620 = vmatpush1.bf16.xpose.msra.mxu0 0
    %621 = vmatprep.subr.bf16.mxu0 0
    %622 = vmatpush1.bf16.xpose.msra.mxu0 0
    %623 = vmatprep.subr.bf16.mxu0 0
    %624 = vmatpush1.bf16.xpose.msra.mxu0 0
    %625 = vmatprep.subr.bf16.mxu0 0
    %626 = vmatpush1.bf16.xpose.msra.mxu0 0
    %627 = vmatprep.subr.bf16.mxu0 0
    %628 = vmatpush1.bf16.xpose.msra.mxu0 0
    %629 = vmatprep.mubr.bf16.mxu0 0
    %630 = vmatmul.mubr.bf16.gmra.mrb[0].mxu0 %v592
    %v631 = vpop.f32.mrb[0].mxu0
    %v632 = vadd.f32 0.0, %v631
    %v633 = vpop.f32.mrb[0].mxu0
    %v634 = vpop.f32.mrb[0].mxu0
    %v635 = vpop.f32.mrb[0].mxu0
    %636 = vdwg.mxu0
    %637 = vrot.lane.b32.xlu0 %v338, 124
    %v638 = vpop.permute.xlu0 %637
    %v640 = vsel %vm350, %v338, 0
    %v643 = vsel %vm350, %v638, 0
    %645 = vmatprep.subr.bf16.mxu0 0
    %646 = vmatpush1.bf16.xpose.msra.mxu0 %v643
    %647 = vmatprep.subr.bf16.mxu0 0
    %648 = vmatpush1.bf16.xpose.msra.mxu0 0
    %649 = vmatprep.subr.bf16.mxu0 0
    %650 = vmatpush1.bf16.xpose.msra.mxu0 0
    %651 = vmatprep.subr.bf16.mxu0 0
    %652 = vmatpush1.bf16.xpose.msra.mxu0 0
    %653 = vmatprep.subr.bf16.mxu0 0
    %654 = vmatpush1.bf16.xpose.msra.mxu0 0
    %655 = vmatprep.subr.bf16.mxu0 0
    %656 = vmatpush1.bf16.xpose.msra.mxu0 0
    %657 = vmatprep.subr.bf16.mxu0 0
    %658 = vmatpush1.bf16.xpose.msra.mxu0 0
    %659 = vmatprep.subr.bf16.mxu0 0
    %660 = vmatpush1.bf16.xpose.msra.mxu0 0
    %661 = vmatprep.subr.bf16.mxu0 0
    %662 = vmatpush1.bf16.xpose.msra.mxu0 0
    %663 = vmatprep.subr.bf16.mxu0 0
    %664 = vmatpush1.bf16.xpose.msra.mxu0 0
    %665 = vmatprep.subr.bf16.mxu0 0
    %666 = vmatpush1.bf16.xpose.msra.mxu0 0
    %667 = vmatprep.subr.bf16.mxu0 0
    %668 = vmatpush1.bf16.xpose.msra.mxu0 0
    %669 = vmatprep.subr.bf16.mxu0 0
    %670 = vmatpush1.bf16.xpose.msra.mxu0 0
    %671 = vmatprep.subr.bf16.mxu0 0
    %672 = vmatpush1.bf16.xpose.msra.mxu0 0
    %673 = vmatprep.subr.bf16.mxu0 0
    %674 = vmatpush1.bf16.xpose.msra.mxu0 0
    %675 = vmatprep.subr.bf16.mxu0 0
    %676 = vmatpush1.bf16.xpose.msra.mxu0 0
    %677 = vmatprep.mubr.bf16.mxu0 0
    %678 = vmatmul.mubr.bf16.gmra.mrb[0].mxu0 %v640
    %v679 = vpop.f32.mrb[0].mxu0
    %v680 = vadd.f32 0.0, %v679
    %v681 = vpop.f32.mrb[0].mxu0
    %v682 = vpop.f32.mrb[0].mxu0
    %v683 = vpop.f32.mrb[0].mxu0
    %684 = vdwg.mxu0
    %685 = vrot.lane.b32.xlu0 %v339, 124
    %v686 = vpop.permute.xlu0 %685
    %v688 = vsel %vm350, %v339, 0
    %v691 = vsel %vm350, %v686, 0
    %693 = vmatprep.subr.bf16.mxu0 0
    %694 = vmatpush1.bf16.xpose.msra.mxu0 %v691
    %695 = vmatprep.subr.bf16.mxu0 0
    %696 = vmatpush1.bf16.xpose.msra.mxu0 0
    %697 = vmatprep.subr.bf16.mxu0 0
    %698 = vmatpush1.bf16.xpose.msra.mxu0 0
    %699 = vmatprep.subr.bf16.mxu0 0
    %700 = vmatpush1.bf16.xpose.msra.mxu0 0
    %701 = vmatprep.subr.bf16.mxu0 0
    %702 = vmatpush1.bf16.xpose.msra.mxu0 0
    %703 = vmatprep.subr.bf16.mxu0 0
    %704 = vmatpush1.bf16.xpose.msra.mxu0 0
    %705 = vmatprep.subr.bf16.mxu0 0
    %706 = vmatpush1.bf16.xpose.msra.mxu0 0
    %707 = vmatprep.subr.bf16.mxu0 0
    %708 = vmatpush1.bf16.xpose.msra.mxu0 0
    %709 = vmatprep.subr.bf16.mxu0 0
    %710 = vmatpush1.bf16.xpose.msra.mxu0 0
    %711 = vmatprep.subr.bf16.mxu0 0
    %712 = vmatpush1.bf16.xpose.msra.mxu0 0
    %713 = vmatprep.subr.bf16.mxu0 0
    %714 = vmatpush1.bf16.xpose.msra.mxu0 0
    %715 = vmatprep.subr.bf16.mxu0 0
    %716 = vmatpush1.bf16.xpose.msra.mxu0 0
    %717 = vmatprep.subr.bf16.mxu0 0
    %718 = vmatpush1.bf16.xpose.msra.mxu0 0
    %719 = vmatprep.subr.bf16.mxu0 0
    %720 = vmatpush1.bf16.xpose.msra.mxu0 0
    %721 = vmatprep.subr.bf16.mxu0 0
    %722 = vmatpush1.bf16.xpose.msra.mxu0 0
    %723 = vmatprep.subr.bf16.mxu0 0
    %724 = vmatpush1.bf16.xpose.msra.mxu0 0
    %725 = vmatprep.mubr.bf16.mxu0 0
    %726 = vmatmul.mubr.bf16.gmra.mrb[0].mxu0 %v688
    %v727 = vpop.f32.mrb[0].mxu0
    %v728 = vadd.f32 0.0, %v727
    %v729 = vpop.f32.mrb[0].mxu0
    %v730 = vpop.f32.mrb[0].mxu0
    %v731 = vpop.f32.mrb[0].mxu0
    %732 = vdwg.mxu0
    %733 = vrot.lane.b32.xlu0 %v340, 124
    %v734 = vpop.permute.xlu0 %733
    %v736 = vsel %vm350, %v340, 0
    %v739 = vsel %vm350, %v734, 0
    %741 = vmatprep.subr.bf16.mxu0 0
    %742 = vmatpush1.bf16.xpose.msra.mxu0 %v739
    %743 = vmatprep.subr.bf16.mxu0 0
    %744 = vmatpush1.bf16.xpose.msra.mxu0 0
    %745 = vmatprep.subr.bf16.mxu0 0
    %746 = vmatpush1.bf16.xpose.msra.mxu0 0
    %747 = vmatprep.subr.bf16.mxu0 0
    %748 = vmatpush1.bf16.xpose.msra.mxu0 0
    %749 = vmatprep.subr.bf16.mxu0 0
    %750 = vmatpush1.bf16.xpose.msra.mxu0 0
    %751 = vmatprep.subr.bf16.mxu0 0
    %752 = vmatpush1.bf16.xpose.msra.mxu0 0
    %753 = vmatprep.subr.bf16.mxu0 0
    %754 = vmatpush1.bf16.xpose.msra.mxu0 0
    %755 = vmatprep.subr.bf16.mxu0 0
    %756 = vmatpush1.bf16.xpose.msra.mxu0 0
    %757 = vmatprep.subr.bf16.mxu0 0
    %758 = vmatpush1.bf16.xpose.msra.mxu0 0
    %759 = vmatprep.subr.bf16.mxu0 0
    %760 = vmatpush1.bf16.xpose.msra.mxu0 0
    %761 = vmatprep.subr.bf16.mxu0 0
    %762 = vmatpush1.bf16.xpose.msra.mxu0 0
    %763 = vmatprep.subr.bf16.mxu0 0
    %764 = vmatpush1.bf16.xpose.msra.mxu0 0
    %765 = vmatprep.subr.bf16.mxu0 0
    %766 = vmatpush1.bf16.xpose.msra.mxu0 0
    %767 = vmatprep.subr.bf16.mxu0 0
    %768 = vmatpush1.bf16.xpose.msra.mxu0 0
    %769 = vmatprep.subr.bf16.mxu0 0
    %770 = vmatpush1.bf16.xpose.msra.mxu0 0
    %771 = vmatprep.subr.bf16.mxu0 0
    %772 = vmatpush1.bf16.xpose.msra.mxu0 0
    %773 = vmatprep.mubr.bf16.mxu0 0
    %774 = vmatmul.mubr.bf16.gmra.mrb[0].mxu0 %v736
    %v775 = vpop.f32.mrb[0].mxu0
    %v776 = vadd.f32 0.0, %v775
    %v777 = vpop.f32.mrb[0].mxu0
    %v778 = vpop.f32.mrb[0].mxu0
    %v779 = vpop.f32.mrb[0].mxu0
    %780 = vdwg.mxu0
    %781 = vrot.lane.b32.xlu0 %v341, 124
    %v782 = vpop.permute.xlu0 %781
    %v784 = vsel %vm350, %v341, 0
    %v787 = vsel %vm350, %v782, 0
    %789 = vmatprep.subr.bf16.mxu0 0
    %790 = vmatpush1.bf16.xpose.msra.mxu0 %v787
    %791 = vmatprep.subr.bf16.mxu0 0
    %792 = vmatpush1.bf16.xpose.msra.mxu0 0
    %793 = vmatprep.subr.bf16.mxu0 0
    %794 = vmatpush1.bf16.xpose.msra.mxu0 0
    %795 = vmatprep.subr.bf16.mxu0 0
    %796 = vmatpush1.bf16.xpose.msra.mxu0 0
    %797 = vmatprep.subr.bf16.mxu0 0
    %798 = vmatpush1.bf16.xpose.msra.mxu0 0
    %799 = vmatprep.subr.bf16.mxu0 0
    %800 = vmatpush1.bf16.xpose.msra.mxu0 0
    %801 = vmatprep.subr.bf16.mxu0 0
    %802 = vmatpush1.bf16.xpose.msra.mxu0 0
    %803 = vmatprep.subr.bf16.mxu0 0
    %804 = vmatpush1.bf16.xpose.msra.mxu0 0
    %805 = vmatprep.subr.bf16.mxu0 0
    %806 = vmatpush1.bf16.xpose.msra.mxu0 0
    %807 = vmatprep.subr.bf16.mxu0 0
    %808 = vmatpush1.bf16.xpose.msra.mxu0 0
    %809 = vmatprep.subr.bf16.mxu0 0
    %810 = vmatpush1.bf16.xpose.msra.mxu0 0
    %811 = vmatprep.subr.bf16.mxu0 0
    %812 = vmatpush1.bf16.xpose.msra.mxu0 0
    %813 = vmatprep.subr.bf16.mxu0 0
    %814 = vmatpush1.bf16.xpose.msra.mxu0 0
    %815 = vmatprep.subr.bf16.mxu0 0
    %816 = vmatpush1.bf16.xpose.msra.mxu0 0
    %817 = vmatprep.subr.bf16.mxu0 0
    %818 = vmatpush1.bf16.xpose.msra.mxu0 0
    %819 = vmatprep.subr.bf16.mxu0 0
    %820 = vmatpush1.bf16.xpose.msra.mxu0 0
    %821 = vmatprep.mubr.bf16.mxu0 0
    %822 = vmatmul.mubr.bf16.gmra.mrb[0].mxu0 %v784
    %v823 = vpop.f32.mrb[0].mxu0
    %v824 = vadd.f32 0.0, %v823
    %v825 = vpop.f32.mrb[0].mxu0
    %v826 = vpop.f32.mrb[0].mxu0
    %v827 = vpop.f32.mrb[0].mxu0
    %828 = vdwg.mxu0
    %829 = vrot.lane.b32.xlu0 %v342, 124
    %v830 = vpop.permute.xlu0 %829
    %v832 = vsel %vm350, %v342, 0
    %v835 = vsel %vm350, %v830, 0
    %837 = vmatprep.subr.bf16.mxu0 0
    %838 = vmatpush1.bf16.xpose.msra.mxu0 %v835
    %839 = vmatprep.subr.bf16.mxu0 0
    %840 = vmatpush1.bf16.xpose.msra.mxu0 0
    %841 = vmatprep.subr.bf16.mxu0 0
    %842 = vmatpush1.bf16.xpose.msra.mxu0 0
    %843 = vmatprep.subr.bf16.mxu0 0
    %844 = vmatpush1.bf16.xpose.msra.mxu0 0
    %845 = vmatprep.subr.bf16.mxu0 0
    %846 = vmatpush1.bf16.xpose.msra.mxu0 0
    %847 = vmatprep.subr.bf16.mxu0 0
    %848 = vmatpush1.bf16.xpose.msra.mxu0 0
    %849 = vmatprep.subr.bf16.mxu0 0
    %850 = vmatpush1.bf16.xpose.msra.mxu0 0
    %851 = vmatprep.subr.bf16.mxu0 0
    %852 = vmatpush1.bf16.xpose.msra.mxu0 0
    %853 = vmatprep.subr.bf16.mxu0 0
    %854 = vmatpush1.bf16.xpose.msra.mxu0 0
    %855 = vmatprep.subr.bf16.mxu0 0
    %856 = vmatpush1.bf16.xpose.msra.mxu0 0
    %857 = vmatprep.subr.bf16.mxu0 0
    %858 = vmatpush1.bf16.xpose.msra.mxu0 0
    %859 = vmatprep.subr.bf16.mxu0 0
    %860 = vmatpush1.bf16.xpose.msra.mxu0 0
    %861 = vmatprep.subr.bf16.mxu0 0
    %862 = vmatpush1.bf16.xpose.msra.mxu0 0
    %863 = vmatprep.subr.bf16.mxu0 0
    %864 = vmatpush1.bf16.xpose.msra.mxu0 0
    %865 = vmatprep.subr.bf16.mxu0 0
    %866 = vmatpush1.bf16.xpose.msra.mxu0 0
    %867 = vmatprep.subr.bf16.mxu0 0
    %868 = vmatpush1.bf16.xpose.msra.mxu0 0
    %869 = vmatprep.mubr.bf16.mxu0 0
    %870 = vmatmul.mubr.bf16.gmra.mrb[0].mxu0 %v832
    %v871 = vpop.f32.mrb[0].mxu0
    %v872 = vadd.f32 0.0, %v871
    %v873 = vpop.f32.mrb[0].mxu0
    %v874 = vpop.f32.mrb[0].mxu0
    %v875 = vpop.f32.mrb[0].mxu0
    %876 = vdwg.mxu0
    %877 = vrot.lane.b32.xlu0 %v343, 124
    %v878 = vpop.permute.xlu0 %877
    %v880 = vsel %vm350, %v343, 0
    %v883 = vsel %vm350, %v878, 0
    %885 = vmatprep.subr.bf16.mxu0 0
    %886 = vmatpush1.bf16.xpose.msra.mxu0 %v883
    %887 = vmatprep.subr.bf16.mxu0 0
    %888 = vmatpush1.bf16.xpose.msra.mxu0 0
    %889 = vmatprep.subr.bf16.mxu0 0
    %890 = vmatpush1.bf16.xpose.msra.mxu0 0
    %891 = vmatprep.subr.bf16.mxu0 0
    %892 = vmatpush1.bf16.xpose.msra.mxu0 0
    %893 = vmatprep.subr.bf16.mxu0 0
    %894 = vmatpush1.bf16.xpose.msra.mxu0 0
    %895 = vmatprep.subr.bf16.mxu0 0
    %896 = vmatpush1.bf16.xpose.msra.mxu0 0
    %897 = vmatprep.subr.bf16.mxu0 0
    %898 = vmatpush1.bf16.xpose.msra.mxu0 0
    %899 = vmatprep.subr.bf16.mxu0 0
    %900 = vmatpush1.bf16.xpose.msra.mxu0 0
    %901 = vmatprep.subr.bf16.mxu0 0
    %902 = vmatpush1.bf16.xpose.msra.mxu0 0
    %903 = vmatprep.subr.bf16.mxu0 0
    %904 = vmatpush1.bf16.xpose.msra.mxu0 0
    %905 = vmatprep.subr.bf16.mxu0 0
    %906 = vmatpush1.bf16.xpose.msra.mxu0 0
    %907 = vmatprep.subr.bf16.mxu0 0
    %908 = vmatpush1.bf16.xpose.msra.mxu0 0
    %909 = vmatprep.subr.bf16.mxu0 0
    %910 = vmatpush1.bf16.xpose.msra.mxu0 0
    %911 = vmatprep.subr.bf16.mxu0 0
    %912 = vmatpush1.bf16.xpose.msra.mxu0 0
    %913 = vmatprep.subr.bf16.mxu0 0
    %914 = vmatpush1.bf16.xpose.msra.mxu0 0
    %915 = vmatprep.subr.bf16.mxu0 0
    %916 = vmatpush1.bf16.xpose.msra.mxu0 0
    %917 = vmatprep.mubr.bf16.mxu0 0
    %918 = vmatmul.mubr.bf16.gmra.mrb[0].mxu0 %v880
    %v919 = vpop.f32.mrb[0].mxu0
    %v920 = vadd.f32 0.0, %v919
    %v921 = vpop.f32.mrb[0].mxu0
    %v922 = vpop.f32.mrb[0].mxu0
    %v923 = vpop.f32.mrb[0].mxu0
    %924 = vdwg.mxu0
    %925 = vrot.lane.b32.xlu0 %v344, 124
    %v926 = vpop.permute.xlu0 %925
    %v928 = vsel %vm350, %v344, 0
    %v931 = vsel %vm350, %v926, 0
    %933 = vmatprep.subr.bf16.mxu0 0
    %934 = vmatpush1.bf16.xpose.msra.mxu0 %v931
    %935 = vmatprep.subr.bf16.mxu0 0
    %936 = vmatpush1.bf16.xpose.msra.mxu0 0
    %937 = vmatprep.subr.bf16.mxu0 0
    %938 = vmatpush1.bf16.xpose.msra.mxu0 0
    %939 = vmatprep.subr.bf16.mxu0 0
    %940 = vmatpush1.bf16.xpose.msra.mxu0 0
    %941 = vmatprep.subr.bf16.mxu0 0
    %942 = vmatpush1.bf16.xpose.msra.mxu0 0
    %943 = vmatprep.subr.bf16.mxu0 0
    %944 = vmatpush1.bf16.xpose.msra.mxu0 0
    %945 = vmatprep.subr.bf16.mxu0 0
    %946 = vmatpush1.bf16.xpose.msra.mxu0 0
    %947 = vmatprep.subr.bf16.mxu0 0
    %948 = vmatpush1.bf16.xpose.msra.mxu0 0
    %949 = vmatprep.subr.bf16.mxu0 0
    %950 = vmatpush1.bf16.xpose.msra.mxu0 0
    %951 = vmatprep.subr.bf16.mxu0 0
    %952 = vmatpush1.bf16.xpose.msra.mxu0 0
    %953 = vmatprep.subr.bf16.mxu0 0
    %954 = vmatpush1.bf16.xpose.msra.mxu0 0
    %955 = vmatprep.subr.bf16.mxu0 0
    %956 = vmatpush1.bf16.xpose.msra.mxu0 0
    %957 = vmatprep.subr.bf16.mxu0 0
    %958 = vmatpush1.bf16.xpose.msra.mxu0 0
    %959 = vmatprep.subr.bf16.mxu0 0
    %960 = vmatpush1.bf16.xpose.msra.mxu0 0
    %961 = vmatprep.subr.bf16.mxu0 0
    %962 = vmatpush1.bf16.xpose.msra.mxu0 0
    %963 = vmatprep.subr.bf16.mxu0 0
    %964 = vmatpush1.bf16.xpose.msra.mxu0 0
    %965 = vmatprep.mubr.bf16.mxu0 0
    %966 = vmatmul.mubr.bf16.gmra.mrb[0].mxu0 %v928
    %v967 = vpop.f32.mrb[0].mxu0
    %v968 = vadd.f32 0.0, %v967
    %v969 = vpop.f32.mrb[0].mxu0
    %v970 = vpop.f32.mrb[0].mxu0
    %v971 = vpop.f32.mrb[0].mxu0
    %972 = vdwg.mxu0
    %973 = vrot.lane.b32.xlu0 %v345, 124
    %v974 = vpop.permute.xlu0 %973
    %v976 = vsel %vm350, %v345, 0
    %v979 = vsel %vm350, %v974, 0
    %981 = vmatprep.subr.bf16.mxu0 0
    %982 = vmatpush1.bf16.xpose.msra.mxu0 %v979
    %983 = vmatprep.subr.bf16.mxu0 0
    %984 = vmatpush1.bf16.xpose.msra.mxu0 0
    %985 = vmatprep.subr.bf16.mxu0 0
    %986 = vmatpush1.bf16.xpose.msra.mxu0 0
    %987 = vmatprep.subr.bf16.mxu0 0
    %988 = vmatpush1.bf16.xpose.msra.mxu0 0
    %989 = vmatprep.subr.bf16.mxu0 0
    %990 = vmatpush1.bf16.xpose.msra.mxu0 0
    %991 = vmatprep.subr.bf16.mxu0 0
    %992 = vmatpush1.bf16.xpose.msra.mxu0 0
    %993 = vmatprep.subr.bf16.mxu0 0
    %994 = vmatpush1.bf16.xpose.msra.mxu0 0
    %995 = vmatprep.subr.bf16.mxu0 0
    %996 = vmatpush1.bf16.xpose.msra.mxu0 0
    %997 = vmatprep.subr.bf16.mxu0 0
    %998 = vmatpush1.bf16.xpose.msra.mxu0 0
    %999 = vmatprep.subr.bf16.mxu0 0
    %1000 = vmatpush1.bf16.xpose.msra.mxu0 0
    %1001 = vmatprep.subr.bf16.mxu0 0
    %1002 = vmatpush1.bf16.xpose.msra.mxu0 0
    %1003 = vmatprep.subr.bf16.mxu0 0
    %1004 = vmatpush1.bf16.xpose.msra.mxu0 0
    %1005 = vmatprep.subr.bf16.mxu0 0
    %1006 = vmatpush1.bf16.xpose.msra.mxu0 0
    %1007 = vmatprep.subr.bf16.mxu0 0
    %1008 = vmatpush1.bf16.xpose.msra.mxu0 0
    %1009 = vmatprep.subr.bf16.mxu0 0
    %1010 = vmatpush1.bf16.xpose.msra.mxu0 0
    %1011 = vmatprep.subr.bf16.mxu0 0
    %1012 = vmatpush1.bf16.xpose.msra.mxu0 0
    %1013 = vmatprep.mubr.bf16.mxu0 0
    %1014 = vmatmul.mubr.bf16.gmra.mrb[0].mxu0 %v976
    %v1015 = vpop.f32.mrb[0].mxu0
    %v1016 = vadd.f32 0.0, %v1015
    %v1017 = vpop.f32.mrb[0].mxu0
    %v1018 = vpop.f32.mrb[0].mxu0
    %v1019 = vpop.f32.mrb[0].mxu0
    %1020 = vdwg.mxu0
    %1021 = vrot.lane.b32.xlu0 %v346, 124
    %v1022 = vpop.permute.xlu0 %1021
    %v1024 = vsel %vm350, %v346, 0
    %v1027 = vsel %vm350, %v1022, 0
    %1029 = vmatprep.subr.bf16.mxu0 0
    %1030 = vmatpush1.bf16.xpose.msra.mxu0 %v1027
    %1031 = vmatprep.subr.bf16.mxu0 0
    %1032 = vmatpush1.bf16.xpose.msra.mxu0 0
    %1033 = vmatprep.subr.bf16.mxu0 0
    %1034 = vmatpush1.bf16.xpose.msra.mxu0 0
    %1035 = vmatprep.subr.bf16.mxu0 0
    %1036 = vmatpush1.bf16.xpose.msra.mxu0 0
    %1037 = vmatprep.subr.bf16.mxu0 0
    %1038 = vmatpush1.bf16.xpose.msra.mxu0 0
    %1039 = vmatprep.subr.bf16.mxu0 0
    %1040 = vmatpush1.bf16.xpose.msra.mxu0 0
    %1041 = vmatprep.subr.bf16.mxu0 0
    %1042 = vmatpush1.bf16.xpose.msra.mxu0 0
    %1043 = vmatprep.subr.bf16.mxu0 0
    %1044 = vmatpush1.bf16.xpose.msra.mxu0 0
    %1045 = vmatprep.subr.bf16.mxu0 0
    %1046 = vmatpush1.bf16.xpose.msra.mxu0 0
    %1047 = vmatprep.subr.bf16.mxu0 0
    %1048 = vmatpush1.bf16.xpose.msra.mxu0 0
    %1049 = vmatprep.subr.bf16.mxu0 0
    %1050 = vmatpush1.bf16.xpose.msra.mxu0 0
    %1051 = vmatprep.subr.bf16.mxu0 0
    %1052 = vmatpush1.bf16.xpose.msra.mxu0 0
    %1053 = vmatprep.subr.bf16.mxu0 0
    %1054 = vmatpush1.bf16.xpose.msra.mxu0 0
    %1055 = vmatprep.subr.bf16.mxu0 0
    %1056 = vmatpush1.bf16.xpose.msra.mxu0 0
    %1057 = vmatprep.subr.bf16.mxu0 0
    %1058 = vmatpush1.bf16.xpose.msra.mxu0 0
    %1059 = vmatprep.subr.bf16.mxu0 0
    %1060 = vmatpush1.bf16.xpose.msra.mxu0 0
    %1061 = vmatprep.mubr.bf16.mxu0 0
    %1062 = vmatmul.mubr.bf16.gmra.mrb[0].mxu0 %v1024
    %v1063 = vpop.f32.mrb[0].mxu0
    %v1064 = vadd.f32 0.0, %v1063
    %v1065 = vpop.f32.mrb[0].mxu0
    %v1066 = vpop.f32.mrb[0].mxu0
    %v1067 = vpop.f32.mrb[0].mxu0
    %1068 = vdwg.mxu0
    %1069 = vrot.lane.b32.xlu0 %v347, 124
    %v1070 = vpop.permute.xlu0 %1069
    %v1072 = vsel %vm350, %v347, 0
    %v1075 = vsel %vm350, %v1070, 0
    %1077 = vmatprep.subr.bf16.mxu0 0
    %1078 = vmatpush1.bf16.xpose.msra.mxu0 %v1075
    %1079 = vmatprep.subr.bf16.mxu0 0
    %1080 = vmatpush1.bf16.xpose.msra.mxu0 0
    %1081 = vmatprep.subr.bf16.mxu0 0
    %1082 = vmatpush1.bf16.xpose.msra.mxu0 0
    %1083 = vmatprep.subr.bf16.mxu0 0
    %1084 = vmatpush1.bf16.xpose.msra.mxu0 0
    %1085 = vmatprep.subr.bf16.mxu0 0
    %1086 = vmatpush1.bf16.xpose.msra.mxu0 0
    %1087 = vmatprep.subr.bf16.mxu0 0
    %1088 = vmatpush1.bf16.xpose.msra.mxu0 0
    %1089 = vmatprep.subr.bf16.mxu0 0
    %1090 = vmatpush1.bf16.xpose.msra.mxu0 0
    %1091 = vmatprep.subr.bf16.mxu0 0
    %1092 = vmatpush1.bf16.xpose.msra.mxu0 0
    %1093 = vmatprep.subr.bf16.mxu0 0
    %1094 = vmatpush1.bf16.xpose.msra.mxu0 0
    %1095 = vmatprep.subr.bf16.mxu0 0
    %1096 = vmatpush1.bf16.xpose.msra.mxu0 0
    %1097 = vmatprep.subr.bf16.mxu0 0
    %1098 = vmatpush1.bf16.xpose.msra.mxu0 0
    %1099 = vmatprep.subr.bf16.mxu0 0
    %1100 = vmatpush1.bf16.xpose.msra.mxu0 0
    %1101 = vmatprep.subr.bf16.mxu0 0
    %1102 = vmatpush1.bf16.xpose.msra.mxu0 0
    %1103 = vmatprep.subr.bf16.mxu0 0
    %1104 = vmatpush1.bf16.xpose.msra.mxu0 0
    %1105 = vmatprep.subr.bf16.mxu0 0
    %1106 = vmatpush1.bf16.xpose.msra.mxu0 0
    %1107 = vmatprep.subr.bf16.mxu0 0
    %1108 = vmatpush1.bf16.xpose.msra.mxu0 0
    %1109 = vmatprep.mubr.bf16.mxu0 0
    %1110 = vmatmul.mubr.bf16.gmra.mrb[0].mxu0 %v1072
    %v1111 = vpop.f32.mrb[0].mxu0
    %v1112 = vadd.f32 0.0, %v1111
    %v1113 = vpop.f32.mrb[0].mxu0
    %v1114 = vpop.f32.mrb[0].mxu0
    %v1115 = vpop.f32.mrb[0].mxu0
    %1116 = vdwg.mxu0
    %vm1117 = vcmask 64512
    %v1118 = vsel %vm1117, %v392, -inf
    %1119 = vmax.xlane.f32.xlu0 %v1118
    %v1120 = vpop.xlane.xlu0 %1119
    %v1121 = vsel %vm1117, %v440, -inf
    %1122 = vmax.xlane.f32.xlu0 %v1121
    %v1123 = vpop.xlane.xlu0 %1122
    %v1124 = vsel %vm1117, %v488, -inf
    %1125 = vmax.xlane.f32.xlu0 %v1124
    %v1126 = vpop.xlane.xlu0 %1125
    %v1127 = vsel %vm1117, %v536, -inf
    %1128 = vmax.xlane.f32.xlu0 %v1127
    %v1129 = vpop.xlane.xlu0 %1128
    %v1130 = vsel %vm1117, %v584, -inf
    %1131 = vmax.xlane.f32.xlu0 %v1130
    %v1132 = vpop.xlane.xlu0 %1131
    %v1133 = vsel %vm1117, %v632, -inf
    %1134 = vmax.xlane.f32.xlu0 %v1133
    %v1135 = vpop.xlane.xlu0 %1134
    %v1136 = vsel %vm1117, %v680, -inf
    %1137 = vmax.xlane.f32.xlu0 %v1136
    %v1138 = vpop.xlane.xlu0 %1137
    %v1139 = vsel %vm1117, %v728, -inf
    %1140 = vmax.xlane.f32.xlu0 %v1139
    %v1141 = vpop.xlane.xlu0 %1140
    %v1142 = vsel %vm1117, %v776, -inf
    %1143 = vmax.xlane.f32.xlu0 %v1142
    %v1144 = vpop.xlane.xlu0 %1143
    %v1145 = vsel %vm1117, %v824, -inf
    %1146 = vmax.xlane.f32.xlu0 %v1145
    %v1147 = vpop.xlane.xlu0 %1146
    %v1148 = vsel %vm1117, %v872, -inf
    %1149 = vmax.xlane.f32.xlu0 %v1148
    %v1150 = vpop.xlane.xlu0 %1149
    %v1151 = vsel %vm1117, %v920, -inf
    %1152 = vmax.xlane.f32.xlu0 %v1151
    %v1153 = vpop.xlane.xlu0 %1152
    %v1154 = vsel %vm1117, %v968, -inf
    %1155 = vmax.xlane.f32.xlu0 %v1154
    %v1156 = vpop.xlane.xlu0 %1155
    %v1157 = vsel %vm1117, %v1016, -inf
    %1158 = vmax.xlane.f32.xlu0 %v1157
    %v1159 = vpop.xlane.xlu0 %1158
    %v1160 = vsel %vm1117, %v1064, -inf
    %1161 = vmax.xlane.f32.xlu0 %v1160
    %v1162 = vpop.xlane.xlu0 %1161
    %v1163 = vsel %vm1117, %v1112, -inf
    %1164 = vmax.xlane.f32.xlu0 %v1163
    %v1165 = vpop.xlane.xlu0 %1164
    %v1166 = vsub.f32 %v392, %v1120
    %v1167 = vsub.f32 %v440, %v1123
    %v1168 = vsub.f32 %v488, %v1126
    %v1169 = vsub.f32 %v536, %v1129
    %v1170 = vsub.f32 %v584, %v1132
    %v1171 = vsub.f32 %v632, %v1135
    %v1172 = vsub.f32 %v680, %v1138
    %v1173 = vsub.f32 %v728, %v1141
    %v1174 = vsub.f32 %v776, %v1144
    %v1175 = vsub.f32 %v824, %v1147
    %v1176 = vsub.f32 %v872, %v1150
    %v1177 = vsub.f32 %v920, %v1153
    %v1178 = vsub.f32 %v968, %v1156
    %v1179 = vsub.f32 %v1016, %v1159
    %v1180 = vsub.f32 %v1064, %v1162
    %v1181 = vsub.f32 %v1112, %v1165
    %v1182 = vmul.f32 %v1166, 1.442695
    %v1183 = vpow.pop %v1182
    %v1184 = vmul.f32 %v1167, 1.442695
    %v1185 = vpow.pop %v1184
    %v1186 = vmul.f32 %v1168, 1.442695
    %v1187 = vpow.pop %v1186
    %v1188 = vmul.f32 %v1169, 1.442695
    %v1189 = vpow.pop %v1188
    %v1190 = vmul.f32 %v1170, 1.442695
    %v1191 = vpow.pop %v1190
    %v1192 = vmul.f32 %v1171, 1.442695
    %v1193 = vpow.pop %v1192
    %v1194 = vmul.f32 %v1172, 1.442695
    %v1195 = vpow.pop %v1194
    %v1196 = vmul.f32 %v1173, 1.442695
    %v1197 = vpow.pop %v1196
    %v1198 = vmul.f32 %v1174, 1.442695
    %v1199 = vpow.pop %v1198
    %v1200 = vmul.f32 %v1175, 1.442695
    %v1201 = vpow.pop %v1200
    %v1202 = vmul.f32 %v1176, 1.442695
    %v1203 = vpow.pop %v1202
    %v1204 = vmul.f32 %v1177, 1.442695
    %v1205 = vpow.pop %v1204
    %v1206 = vmul.f32 %v1178, 1.442695
    %v1207 = vpow.pop %v1206
    %v1208 = vmul.f32 %v1179, 1.442695
    %v1209 = vpow.pop %v1208
    %v1210 = vmul.f32 %v1180, 1.442695
    %v1211 = vpow.pop %v1210
    %v1212 = vmul.f32 %v1181, 1.442695
    %v1213 = vpow.pop %v1212
    %v1214 = vsel %vm1117, %v1183, 0.0
    %1215 = vadd.xlane.f32.xlu0 %v1214
    %v1216 = vpop.xlane.xlu0 %1215
    %v1217 = vsel %vm1117, %v1185, 0.0
    %1218 = vadd.xlane.f32.xlu0 %v1217
    %v1219 = vpop.xlane.xlu0 %1218
    %v1220 = vsel %vm1117, %v1187, 0.0
    %1221 = vadd.xlane.f32.xlu0 %v1220
    %v1222 = vpop.xlane.xlu0 %1221
    %v1223 = vsel %vm1117, %v1189, 0.0
    %1224 = vadd.xlane.f32.xlu0 %v1223
    %v1225 = vpop.xlane.xlu0 %1224
    %v1226 = vsel %vm1117, %v1191, 0.0
    %1227 = vadd.xlane.f32.xlu0 %v1226
    %v1228 = vpop.xlane.xlu0 %1227
    %v1229 = vsel %vm1117, %v1193, 0.0
    %1230 = vadd.xlane.f32.xlu0 %v1229
    %v1231 = vpop.xlane.xlu0 %1230
    %v1232 = vsel %vm1117, %v1195, 0.0
    %1233 = vadd.xlane.f32.xlu0 %v1232
    %v1234 = vpop.xlane.xlu0 %1233
    %v1235 = vsel %vm1117, %v1197, 0.0
    %1236 = vadd.xlane.f32.xlu0 %v1235
    %v1237 = vpop.xlane.xlu0 %1236
    %v1238 = vsel %vm1117, %v1199, 0.0
    %1239 = vadd.xlane.f32.xlu0 %v1238
    %v1240 = vpop.xlane.xlu0 %1239
    %v1241 = vsel %vm1117, %v1201, 0.0
    %1242 = vadd.xlane.f32.xlu0 %v1241
    %v1243 = vpop.xlane.xlu0 %1242
    %v1244 = vsel %vm1117, %v1203, 0.0
    %1245 = vadd.xlane.f32.xlu0 %v1244
    %v1246 = vpop.xlane.xlu0 %1245
    %v1247 = vsel %vm1117, %v1205, 0.0
    %1248 = vadd.xlane.f32.xlu0 %v1247
    %v1249 = vpop.xlane.xlu0 %1248
    %v1250 = vsel %vm1117, %v1207, 0.0
    %1251 = vadd.xlane.f32.xlu0 %v1250
    %v1252 = vpop.xlane.xlu0 %1251
    %v1253 = vsel %vm1117, %v1209, 0.0
    %1254 = vadd.xlane.f32.xlu0 %v1253
    %v1255 = vpop.xlane.xlu0 %1254
    %v1256 = vsel %vm1117, %v1211, 0.0
    %1257 = vadd.xlane.f32.xlu0 %v1256
    %v1258 = vpop.xlane.xlu0 %1257
    %v1259 = vsel %vm1117, %v1213, 0.0
    %1260 = vadd.xlane.f32.xlu0 %v1259
    %v1261 = vpop.xlane.xlu0 %1260
    %v1262 = vrcp.pop %v1216
    %v1263 = vrcp.pop %v1219
    %v1264 = vrcp.pop %v1222
    %v1265 = vrcp.pop %v1225
    %v1266 = vrcp.pop %v1228
    %v1267 = vrcp.pop %v1231
    %v1268 = vrcp.pop %v1234
    %v1269 = vrcp.pop %v1237
    %v1270 = vrcp.pop %v1240
    %v1271 = vrcp.pop %v1243
    %v1272 = vrcp.pop %v1246
    %v1273 = vrcp.pop %v1249
    %v1274 = vrcp.pop %v1252
    %v1275 = vrcp.pop %v1255
    %v1276 = vrcp.pop %v1258
    %v1277 = vrcp.pop %v1261
    %v1278 = vmul.f32 %v1183, %v1262
    %v1279 = vmul.f32 %v1185, %v1263
    %v1280 = vmul.f32 %v1187, %v1264
    %v1281 = vmul.f32 %v1189, %v1265
    %v1282 = vmul.f32 %v1191, %v1266
    %v1283 = vmul.f32 %v1193, %v1267
    %v1284 = vmul.f32 %v1195, %v1268
    %v1285 = vmul.f32 %v1197, %v1269
    %v1286 = vmul.f32 %v1199, %v1270
    %v1287 = vmul.f32 %v1201, %v1271
    %v1288 = vmul.f32 %v1203, %v1272
    %v1289 = vmul.f32 %v1205, %v1273
    %v1290 = vmul.f32 %v1207, %v1274
    %v1291 = vmul.f32 %v1209, %v1275
    %v1292 = vmul.f32 %v1211, %v1276
    %v1293 = vmul.f32 %v1213, %v1277
    %v1294 = vpack.c.bf16 %v1278, %v1278
    %v1295 = vpack.c.bf16 %v1279, %v1279
    %v1296 = vpack.c.bf16 %v1280, %v1280
    %v1297 = vpack.c.bf16 %v1281, %v1281
    %v1298 = vpack.c.bf16 %v1282, %v1282
    %v1299 = vpack.c.bf16 %v1283, %v1283
    %v1300 = vpack.c.bf16 %v1284, %v1284
    %v1301 = vpack.c.bf16 %v1285, %v1285
    %v1302 = vpack.c.bf16 %v1286, %v1286
    %v1303 = vpack.c.bf16 %v1287, %v1287
    %v1304 = vpack.c.bf16 %v1288, %v1288
    %v1305 = vpack.c.bf16 %v1289, %v1289
    %v1306 = vpack.c.bf16 %v1290, %v1290
    %v1307 = vpack.c.bf16 %v1291, %v1291
    %v1308 = vpack.c.bf16 %v1292, %v1292
    %v1309 = vpack.c.bf16 %v1293, %v1293
    %1310 = vrot.lane.b32.xlu0 %v332, 120
    %v1311 = vpop.permute.xlu0 %1310
    %v1313 = vsel %vm1117, %v1294, 0
    %vm1315 = vcmask 1043456
    %v1317 = vsel %vm1315, %v1311, 0
    %1319 = vmatprep.subr.bf16.mxu0 0
    %1320 = vmatpush1.bf16.msra.mxu0 %v1317
    %1321 = vmatprep.subr.bf16.mxu0 0
    %1322 = vmatpush1.bf16.msra.mxu0 0
    %1323 = vmatprep.subr.bf16.mxu0 0
    %1324 = vmatpush1.bf16.msra.mxu0 0
    %1325 = vmatprep.subr.bf16.mxu0 0
    %1326 = vmatpush1.bf16.msra.mxu0 0
    %1327 = vmatprep.subr.bf16.mxu0 0
    %1328 = vmatpush1.bf16.msra.mxu0 0
    %1329 = vmatprep.subr.bf16.mxu0 0
    %1330 = vmatpush1.bf16.msra.mxu0 0
    %1331 = vmatprep.subr.bf16.mxu0 0
    %1332 = vmatpush1.bf16.msra.mxu0 0
    %1333 = vmatprep.subr.bf16.mxu0 0
    %1334 = vmatpush1.bf16.msra.mxu0 0
    %1335 = vmatprep.subr.bf16.mxu0 0
    %1336 = vmatpush1.bf16.msra.mxu0 0
    %1337 = vmatprep.subr.bf16.mxu0 0
    %1338 = vmatpush1.bf16.msra.mxu0 0
    %1339 = vmatprep.subr.bf16.mxu0 0
    %1340 = vmatpush1.bf16.msra.mxu0 0
    %1341 = vmatprep.subr.bf16.mxu0 0
    %1342 = vmatpush1.bf16.msra.mxu0 0
    %1343 = vmatprep.subr.bf16.mxu0 0
    %1344 = vmatpush1.bf16.msra.mxu0 0
    %1345 = vmatprep.subr.bf16.mxu0 0
    %1346 = vmatpush1.bf16.msra.mxu0 0
    %1347 = vmatprep.subr.bf16.mxu0 0
    %1348 = vmatpush1.bf16.msra.mxu0 0
    %1349 = vmatprep.subr.bf16.mxu0 0
    %1350 = vmatpush1.bf16.msra.mxu0 0
    %1351 = vmatprep.mubr.bf16.mxu0 0
    %1352 = vmatmul.mubr.bf16.gmra.mrb[0].mxu0 %v1313
    %v1353 = vpop.f32.mrb[0].mxu0
    %v1354 = vadd.f32 0.0, %v1353
    %v1355 = vpop.f32.mrb[0].mxu0
    %v1356 = vpop.f32.mrb[0].mxu0
    %v1357 = vpop.f32.mrb[0].mxu0
    %1358 = vdwg.mxu0
    %1359 = vrot.lane.b32.xlu0 %v333, 120
    %v1360 = vpop.permute.xlu0 %1359
    %v1362 = vsel %vm1117, %v1295, 0
    %v1365 = vsel %vm1315, %v1360, 0
    %1367 = vmatprep.subr.bf16.mxu0 0
    %1368 = vmatpush1.bf16.msra.mxu0 %v1365
    %1369 = vmatprep.subr.bf16.mxu0 0
    %1370 = vmatpush1.bf16.msra.mxu0 0
    %1371 = vmatprep.subr.bf16.mxu0 0
    %1372 = vmatpush1.bf16.msra.mxu0 0
    %1373 = vmatprep.subr.bf16.mxu0 0
    %1374 = vmatpush1.bf16.msra.mxu0 0
    %1375 = vmatprep.subr.bf16.mxu0 0
    %1376 = vmatpush1.bf16.msra.mxu0 0
    %1377 = vmatprep.subr.bf16.mxu0 0
    %1378 = vmatpush1.bf16.msra.mxu0 0
    %1379 = vmatprep.subr.bf16.mxu0 0
    %1380 = vmatpush1.bf16.msra.mxu0 0
    %1381 = vmatprep.subr.bf16.mxu0 0
    %1382 = vmatpush1.bf16.msra.mxu0 0
    %1383 = vmatprep.subr.bf16.mxu0 0
    %1384 = vmatpush1.bf16.msra.mxu0 0
    %1385 = vmatprep.subr.bf16.mxu0 0
    %1386 = vmatpush1.bf16.msra.mxu0 0
    %1387 = vmatprep.subr.bf16.mxu0 0
    %1388 = vmatpush1.bf16.msra.mxu0 0
    %1389 = vmatprep.subr.bf16.mxu0 0
    %1390 = vmatpush1.bf16.msra.mxu0 0
    %1391 = vmatprep.subr.bf16.mxu0 0
    %1392 = vmatpush1.bf16.msra.mxu0 0
    %1393 = vmatprep.subr.bf16.mxu0 0
    %1394 = vmatpush1.bf16.msra.mxu0 0
    %1395 = vmatprep.subr.bf16.mxu0 0
    %1396 = vmatpush1.bf16.msra.mxu0 0
    %1397 = vmatprep.subr.bf16.mxu0 0
    %1398 = vmatpush1.bf16.msra.mxu0 0
    %1399 = vmatprep.mubr.bf16.mxu0 0
    %1400 = vmatmul.mubr.bf16.gmra.mrb[0].mxu0 %v1362
    %v1401 = vpop.f32.mrb[0].mxu0
    %v1402 = vadd.f32 0.0, %v1401
    %v1403 = vpop.f32.mrb[0].mxu0
    %v1404 = vpop.f32.mrb[0].mxu0
    %v1405 = vpop.f32.mrb[0].mxu0
    %1406 = vdwg.mxu0
    %1407 = vrot.lane.b32.xlu0 %v334, 120
    %v1408 = vpop.permute.xlu0 %1407
    %v1410 = vsel %vm1117, %v1296, 0
    %v1413 = vsel %vm1315, %v1408, 0
    %1415 = vmatprep.subr.bf16.mxu0 0
    %1416 = vmatpush1.bf16.msra.mxu0 %v1413
    %1417 = vmatprep.subr.bf16.mxu0 0
    %1418 = vmatpush1.bf16.msra.mxu0 0
    %1419 = vmatprep.subr.bf16.mxu0 0
    %1420 = vmatpush1.bf16.msra.mxu0 0
    %1421 = vmatprep.subr.bf16.mxu0 0
    %1422 = vmatpush1.bf16.msra.mxu0 0
    %1423 = vmatprep.subr.bf16.mxu0 0
    %1424 = vmatpush1.bf16.msra.mxu0 0
    %1425 = vmatprep.subr.bf16.mxu0 0
    %1426 = vmatpush1.bf16.msra.mxu0 0
    %1427 = vmatprep.subr.bf16.mxu0 0
    %1428 = vmatpush1.bf16.msra.mxu0 0
    %1429 = vmatprep.subr.bf16.mxu0 0
    %1430 = vmatpush1.bf16.msra.mxu0 0
    %1431 = vmatprep.subr.bf16.mxu0 0
    %1432 = vmatpush1.bf16.msra.mxu0 0
    %1433 = vmatprep.subr.bf16.mxu0 0
    %1434 = vmatpush1.bf16.msra.mxu0 0
    %1435 = vmatprep.subr.bf16.mxu0 0
    %1436 = vmatpush1.bf16.msra.mxu0 0
    %1437 = vmatprep.subr.bf16.mxu0 0
    %1438 = vmatpush1.bf16.msra.mxu0 0
    %1439 = vmatprep.subr.bf16.mxu0 0
    %1440 = vmatpush1.bf16.msra.mxu0 0
    %1441 = vmatprep.subr.bf16.mxu0 0
    %1442 = vmatpush1.bf16.msra.mxu0 0
    %1443 = vmatprep.subr.bf16.mxu0 0
    %1444 = vmatpush1.bf16.msra.mxu0 0
    %1445 = vmatprep.subr.bf16.mxu0 0
    %1446 = vmatpush1.bf16.msra.mxu0 0
    %1447 = vmatprep.mubr.bf16.mxu0 0
    %1448 = vmatmul.mubr.bf16.gmra.mrb[0].mxu0 %v1410
    %v1449 = vpop.f32.mrb[0].mxu0
    %v1450 = vadd.f32 0.0, %v1449
    %v1451 = vpop.f32.mrb[0].mxu0
    %v1452 = vpop.f32.mrb[0].mxu0
    %v1453 = vpop.f32.mrb[0].mxu0
    %1454 = vdwg.mxu0
    %1455 = vrot.lane.b32.xlu0 %v335, 120
    %v1456 = vpop.permute.xlu0 %1455
    %v1458 = vsel %vm1117, %v1297, 0
    %v1461 = vsel %vm1315, %v1456, 0
    %1463 = vmatprep.subr.bf16.mxu0 0
    %1464 = vmatpush1.bf16.msra.mxu0 %v1461
    %1465 = vmatprep.subr.bf16.mxu0 0
    %1466 = vmatpush1.bf16.msra.mxu0 0
    %1467 = vmatprep.subr.bf16.mxu0 0
    %1468 = vmatpush1.bf16.msra.mxu0 0
    %1469 = vmatprep.subr.bf16.mxu0 0
    %1470 = vmatpush1.bf16.msra.mxu0 0
    %1471 = vmatprep.subr.bf16.mxu0 0
    %1472 = vmatpush1.bf16.msra.mxu0 0
    %1473 = vmatprep.subr.bf16.mxu0 0
    %1474 = vmatpush1.bf16.msra.mxu0 0
    %1475 = vmatprep.subr.bf16.mxu0 0
    %1476 = vmatpush1.bf16.msra.mxu0 0
    %1477 = vmatprep.subr.bf16.mxu0 0
    %1478 = vmatpush1.bf16.msra.mxu0 0
    %1479 = vmatprep.subr.bf16.mxu0 0
    %1480 = vmatpush1.bf16.msra.mxu0 0
    %1481 = vmatprep.subr.bf16.mxu0 0
    %1482 = vmatpush1.bf16.msra.mxu0 0
    %1483 = vmatprep.subr.bf16.mxu0 0
    %1484 = vmatpush1.bf16.msra.mxu0 0
    %1485 = vmatprep.subr.bf16.mxu0 0
    %1486 = vmatpush1.bf16.msra.mxu0 0
    %1487 = vmatprep.subr.bf16.mxu0 0
    %1488 = vmatpush1.bf16.msra.mxu0 0
    %1489 = vmatprep.subr.bf16.mxu0 0
    %1490 = vmatpush1.bf16.msra.mxu0 0
    %1491 = vmatprep.subr.bf16.mxu0 0
    %1492 = vmatpush1.bf16.msra.mxu0 0
    %1493 = vmatprep.subr.bf16.mxu0 0
    %1494 = vmatpush1.bf16.msra.mxu0 0
    %1495 = vmatprep.mubr.bf16.mxu0 0
    %1496 = vmatmul.mubr.bf16.gmra.mrb[0].mxu0 %v1458
    %v1497 = vpop.f32.mrb[0].mxu0
    %v1498 = vadd.f32 0.0, %v1497
    %v1499 = vpop.f32.mrb[0].mxu0
    %v1500 = vpop.f32.mrb[0].mxu0
    %v1501 = vpop.f32.mrb[0].mxu0
    %1502 = vdwg.mxu0
    %1503 = vrot.lane.b32.xlu0 %v336, 120
    %v1504 = vpop.permute.xlu0 %1503
    %v1506 = vsel %vm1117, %v1298, 0
    %v1509 = vsel %vm1315, %v1504, 0
    %1511 = vmatprep.subr.bf16.mxu0 0
    %1512 = vmatpush1.bf16.msra.mxu0 %v1509
    %1513 = vmatprep.subr.bf16.mxu0 0
    %1514 = vmatpush1.bf16.msra.mxu0 0
    %1515 = vmatprep.subr.bf16.mxu0 0
    %1516 = vmatpush1.bf16.msra.mxu0 0
    %1517 = vmatprep.subr.bf16.mxu0 0
    %1518 = vmatpush1.bf16.msra.mxu0 0
    %1519 = vmatprep.subr.bf16.mxu0 0
    %1520 = vmatpush1.bf16.msra.mxu0 0
    %1521 = vmatprep.subr.bf16.mxu0 0
    %1522 = vmatpush1.bf16.msra.mxu0 0
    %1523 = vmatprep.subr.bf16.mxu0 0
    %1524 = vmatpush1.bf16.msra.mxu0 0
    %1525 = vmatprep.subr.bf16.mxu0 0
    %1526 = vmatpush1.bf16.msra.mxu0 0
    %1527 = vmatprep.subr.bf16.mxu0 0
    %1528 = vmatpush1.bf16.msra.mxu0 0
    %1529 = vmatprep.subr.bf16.mxu0 0
    %1530 = vmatpush1.bf16.msra.mxu0 0
    %1531 = vmatprep.subr.bf16.mxu0 0
    %1532 = vmatpush1.bf16.msra.mxu0 0
    %1533 = vmatprep.subr.bf16.mxu0 0
    %1534 = vmatpush1.bf16.msra.mxu0 0
    %1535 = vmatprep.subr.bf16.mxu0 0
    %1536 = vmatpush1.bf16.msra.mxu0 0
    %1537 = vmatprep.subr.bf16.mxu0 0
    %1538 = vmatpush1.bf16.msra.mxu0 0
    %1539 = vmatprep.subr.bf16.mxu0 0
    %1540 = vmatpush1.bf16.msra.mxu0 0
    %1541 = vmatprep.subr.bf16.mxu0 0
    %1542 = vmatpush1.bf16.msra.mxu0 0
    %1543 = vmatprep.mubr.bf16.mxu0 0
    %1544 = vmatmul.mubr.bf16.gmra.mrb[0].mxu0 %v1506
    %v1545 = vpop.f32.mrb[0].mxu0
    %v1546 = vadd.f32 0.0, %v1545
    %v1547 = vpop.f32.mrb[0].mxu0
    %v1548 = vpop.f32.mrb[0].mxu0
    %v1549 = vpop.f32.mrb[0].mxu0
    %1550 = vdwg.mxu0
    %1551 = vrot.lane.b32.xlu0 %v337, 120
    %v1552 = vpop.permute.xlu0 %1551
    %v1554 = vsel %vm1117, %v1299, 0
    %v1557 = vsel %vm1315, %v1552, 0
    %1559 = vmatprep.subr.bf16.mxu0 0
    %1560 = vmatpush1.bf16.msra.mxu0 %v1557
    %1561 = vmatprep.subr.bf16.mxu0 0
    %1562 = vmatpush1.bf16.msra.mxu0 0
    %1563 = vmatprep.subr.bf16.mxu0 0
    %1564 = vmatpush1.bf16.msra.mxu0 0
    %1565 = vmatprep.subr.bf16.mxu0 0
    %1566 = vmatpush1.bf16.msra.mxu0 0
    %1567 = vmatprep.subr.bf16.mxu0 0
    %1568 = vmatpush1.bf16.msra.mxu0 0
    %1569 = vmatprep.subr.bf16.mxu0 0
    %1570 = vmatpush1.bf16.msra.mxu0 0
    %1571 = vmatprep.subr.bf16.mxu0 0
    %1572 = vmatpush1.bf16.msra.mxu0 0
    %1573 = vmatprep.subr.bf16.mxu0 0
    %1574 = vmatpush1.bf16.msra.mxu0 0
    %1575 = vmatprep.subr.bf16.mxu0 0
    %1576 = vmatpush1.bf16.msra.mxu0 0
    %1577 = vmatprep.subr.bf16.mxu0 0
    %1578 = vmatpush1.bf16.msra.mxu0 0
    %1579 = vmatprep.subr.bf16.mxu0 0
    %1580 = vmatpush1.bf16.msra.mxu0 0
    %1581 = vmatprep.subr.bf16.mxu0 0
    %1582 = vmatpush1.bf16.msra.mxu0 0
    %1583 = vmatprep.subr.bf16.mxu0 0
    %1584 = vmatpush1.bf16.msra.mxu0 0
    %1585 = vmatprep.subr.bf16.mxu0 0
    %1586 = vmatpush1.bf16.msra.mxu0 0
    %1587 = vmatprep.subr.bf16.mxu0 0
    %1588 = vmatpush1.bf16.msra.mxu0 0
    %1589 = vmatprep.subr.bf16.mxu0 0
    %1590 = vmatpush1.bf16.msra.mxu0 0
    %1591 = vmatprep.mubr.bf16.mxu0 0
    %1592 = vmatmul.mubr.bf16.gmra.mrb[0].mxu0 %v1554
    %v1593 = vpop.f32.mrb[0].mxu0
    %v1594 = vadd.f32 0.0, %v1593
    %v1595 = vpop.f32.mrb[0].mxu0
    %v1596 = vpop.f32.mrb[0].mxu0
    %v1597 = vpop.f32.mrb[0].mxu0
    %1598 = vdwg.mxu0
    %1599 = vrot.lane.b32.xlu0 %v338, 120
    %v1600 = vpop.permute.xlu0 %1599
    %v1602 = vsel %vm1117, %v1300, 0
    %v1605 = vsel %vm1315, %v1600, 0
    %1607 = vmatprep.subr.bf16.mxu0 0
    %1608 = vmatpush1.bf16.msra.mxu0 %v1605
    %1609 = vmatprep.subr.bf16.mxu0 0
    %1610 = vmatpush1.bf16.msra.mxu0 0
    %1611 = vmatprep.subr.bf16.mxu0 0
    %1612 = vmatpush1.bf16.msra.mxu0 0
    %1613 = vmatprep.subr.bf16.mxu0 0
    %1614 = vmatpush1.bf16.msra.mxu0 0
    %1615 = vmatprep.subr.bf16.mxu0 0
    %1616 = vmatpush1.bf16.msra.mxu0 0
    %1617 = vmatprep.subr.bf16.mxu0 0
    %1618 = vmatpush1.bf16.msra.mxu0 0
    %1619 = vmatprep.subr.bf16.mxu0 0
    %1620 = vmatpush1.bf16.msra.mxu0 0
    %1621 = vmatprep.subr.bf16.mxu0 0
    %1622 = vmatpush1.bf16.msra.mxu0 0
    %1623 = vmatprep.subr.bf16.mxu0 0
    %1624 = vmatpush1.bf16.msra.mxu0 0
    %1625 = vmatprep.subr.bf16.mxu0 0
    %1626 = vmatpush1.bf16.msra.mxu0 0
    %1627 = vmatprep.subr.bf16.mxu0 0
    %1628 = vmatpush1.bf16.msra.mxu0 0
    %1629 = vmatprep.subr.bf16.mxu0 0
    %1630 = vmatpush1.bf16.msra.mxu0 0
    %1631 = vmatprep.subr.bf16.mxu0 0
    %1632 = vmatpush1.bf16.msra.mxu0 0
    %1633 = vmatprep.subr.bf16.mxu0 0
    %1634 = vmatpush1.bf16.msra.mxu0 0
    %1635 = vmatprep.subr.bf16.mxu0 0
    %1636 = vmatpush1.bf16.msra.mxu0 0
    %1637 = vmatprep.subr.bf16.mxu0 0
    %1638 = vmatpush1.bf16.msra.mxu0 0
    %1639 = vmatprep.mubr.bf16.mxu0 0
    %1640 = vmatmul.mubr.bf16.gmra.mrb[0].mxu0 %v1602
    %v1641 = vpop.f32.mrb[0].mxu0
    %v1642 = vadd.f32 0.0, %v1641
    %v1643 = vpop.f32.mrb[0].mxu0
    %v1644 = vpop.f32.mrb[0].mxu0
    %v1645 = vpop.f32.mrb[0].mxu0
    %1646 = vdwg.mxu0
    %1647 = vrot.lane.b32.xlu0 %v339, 120
    %v1648 = vpop.permute.xlu0 %1647
    %v1650 = vsel %vm1117, %v1301, 0
    %v1653 = vsel %vm1315, %v1648, 0
    %1655 = vmatprep.subr.bf16.mxu0 0
    %1656 = vmatpush1.bf16.msra.mxu0 %v1653
    %1657 = vmatprep.subr.bf16.mxu0 0
    %1658 = vmatpush1.bf16.msra.mxu0 0
    %1659 = vmatprep.subr.bf16.mxu0 0
    %1660 = vmatpush1.bf16.msra.mxu0 0
    %1661 = vmatprep.subr.bf16.mxu0 0
    %1662 = vmatpush1.bf16.msra.mxu0 0
    %1663 = vmatprep.subr.bf16.mxu0 0
    %1664 = vmatpush1.bf16.msra.mxu0 0
    %1665 = vmatprep.subr.bf16.mxu0 0
    %1666 = vmatpush1.bf16.msra.mxu0 0
    %1667 = vmatprep.subr.bf16.mxu0 0
    %1668 = vmatpush1.bf16.msra.mxu0 0
    %1669 = vmatprep.subr.bf16.mxu0 0
    %1670 = vmatpush1.bf16.msra.mxu0 0
    %1671 = vmatprep.subr.bf16.mxu0 0
    %1672 = vmatpush1.bf16.msra.mxu0 0
    %1673 = vmatprep.subr.bf16.mxu0 0
    %1674 = vmatpush1.bf16.msra.mxu0 0
    %1675 = vmatprep.subr.bf16.mxu0 0
    %1676 = vmatpush1.bf16.msra.mxu0 0
    %1677 = vmatprep.subr.bf16.mxu0 0
    %1678 = vmatpush1.bf16.msra.mxu0 0
    %1679 = vmatprep.subr.bf16.mxu0 0
    %1680 = vmatpush1.bf16.msra.mxu0 0
    %1681 = vmatprep.subr.bf16.mxu0 0
    %1682 = vmatpush1.bf16.msra.mxu0 0
    %1683 = vmatprep.subr.bf16.mxu0 0
    %1684 = vmatpush1.bf16.msra.mxu0 0
    %1685 = vmatprep.subr.bf16.mxu0 0
    %1686 = vmatpush1.bf16.msra.mxu0 0
    %1687 = vmatprep.mubr.bf16.mxu0 0
    %1688 = vmatmul.mubr.bf16.gmra.mrb[0].mxu0 %v1650
    %v1689 = vpop.f32.mrb[0].mxu0
    %v1690 = vadd.f32 0.0, %v1689
    %v1691 = vpop.f32.mrb[0].mxu0
    %v1692 = vpop.f32.mrb[0].mxu0
    %v1693 = vpop.f32.mrb[0].mxu0
    %1694 = vdwg.mxu0
    %1695 = vrot.lane.b32.xlu0 %v340, 120
    %v1696 = vpop.permute.xlu0 %1695
    %v1698 = vsel %vm1117, %v1302, 0
    %v1701 = vsel %vm1315, %v1696, 0
    %1703 = vmatprep.subr.bf16.mxu0 0
    %1704 = vmatpush1.bf16.msra.mxu0 %v1701
    %1705 = vmatprep.subr.bf16.mxu0 0
    %1706 = vmatpush1.bf16.msra.mxu0 0
    %1707 = vmatprep.subr.bf16.mxu0 0
    %1708 = vmatpush1.bf16.msra.mxu0 0
    %1709 = vmatprep.subr.bf16.mxu0 0
    %1710 = vmatpush1.bf16.msra.mxu0 0
    %1711 = vmatprep.subr.bf16.mxu0 0
    %1712 = vmatpush1.bf16.msra.mxu0 0
    %1713 = vmatprep.subr.bf16.mxu0 0
    %1714 = vmatpush1.bf16.msra.mxu0 0
    %1715 = vmatprep.subr.bf16.mxu0 0
    %1716 = vmatpush1.bf16.msra.mxu0 0
    %1717 = vmatprep.subr.bf16.mxu0 0
    %1718 = vmatpush1.bf16.msra.mxu0 0
    %1719 = vmatprep.subr.bf16.mxu0 0
    %1720 = vmatpush1.bf16.msra.mxu0 0
    %1721 = vmatprep.subr.bf16.mxu0 0
    %1722 = vmatpush1.bf16.msra.mxu0 0
    %1723 = vmatprep.subr.bf16.mxu0 0
    %1724 = vmatpush1.bf16.msra.mxu0 0
    %1725 = vmatprep.subr.bf16.mxu0 0
    %1726 = vmatpush1.bf16.msra.mxu0 0
    %1727 = vmatprep.subr.bf16.mxu0 0
    %1728 = vmatpush1.bf16.msra.mxu0 0
    %1729 = vmatprep.subr.bf16.mxu0 0
    %1730 = vmatpush1.bf16.msra.mxu0 0
    %1731 = vmatprep.subr.bf16.mxu0 0
    %1732 = vmatpush1.bf16.msra.mxu0 0
    %1733 = vmatprep.subr.bf16.mxu0 0
    %1734 = vmatpush1.bf16.msra.mxu0 0
    %1735 = vmatprep.mubr.bf16.mxu0 0
    %1736 = vmatmul.mubr.bf16.gmra.mrb[0].mxu0 %v1698
    %v1737 = vpop.f32.mrb[0].mxu0
    %v1738 = vadd.f32 0.0, %v1737
    %v1739 = vpop.f32.mrb[0].mxu0
    %v1740 = vpop.f32.mrb[0].mxu0
    %v1741 = vpop.f32.mrb[0].mxu0
    %1742 = vdwg.mxu0
    %1743 = vrot.lane.b32.xlu0 %v341, 120
    %v1744 = vpop.permute.xlu0 %1743
    %v1746 = vsel %vm1117, %v1303, 0
    %v1749 = vsel %vm1315, %v1744, 0
    %1751 = vmatprep.subr.bf16.mxu0 0
    %1752 = vmatpush1.bf16.msra.mxu0 %v1749
    %1753 = vmatprep.subr.bf16.mxu0 0
    %1754 = vmatpush1.bf16.msra.mxu0 0
    %1755 = vmatprep.subr.bf16.mxu0 0
    %1756 = vmatpush1.bf16.msra.mxu0 0
    %1757 = vmatprep.subr.bf16.mxu0 0
    %1758 = vmatpush1.bf16.msra.mxu0 0
    %1759 = vmatprep.subr.bf16.mxu0 0
    %1760 = vmatpush1.bf16.msra.mxu0 0
    %1761 = vmatprep.subr.bf16.mxu0 0
    %1762 = vmatpush1.bf16.msra.mxu0 0
    %1763 = vmatprep.subr.bf16.mxu0 0
    %1764 = vmatpush1.bf16.msra.mxu0 0
    %1765 = vmatprep.subr.bf16.mxu0 0
    %1766 = vmatpush1.bf16.msra.mxu0 0
    %1767 = vmatprep.subr.bf16.mxu0 0
    %1768 = vmatpush1.bf16.msra.mxu0 0
    %1769 = vmatprep.subr.bf16.mxu0 0
    %1770 = vmatpush1.bf16.msra.mxu0 0
    %1771 = vmatprep.subr.bf16.mxu0 0
    %1772 = vmatpush1.bf16.msra.mxu0 0
    %1773 = vmatprep.subr.bf16.mxu0 0
    %1774 = vmatpush1.bf16.msra.mxu0 0
    %1775 = vmatprep.subr.bf16.mxu0 0
    %1776 = vmatpush1.bf16.msra.mxu0 0
    %1777 = vmatprep.subr.bf16.mxu0 0
    %1778 = vmatpush1.bf16.msra.mxu0 0
    %1779 = vmatprep.subr.bf16.mxu0 0
    %1780 = vmatpush1.bf16.msra.mxu0 0
    %1781 = vmatprep.subr.bf16.mxu0 0
    %1782 = vmatpush1.bf16.msra.mxu0 0
    %1783 = vmatprep.mubr.bf16.mxu0 0
    %1784 = vmatmul.mubr.bf16.gmra.mrb[0].mxu0 %v1746
    %v1785 = vpop.f32.mrb[0].mxu0
    %v1786 = vadd.f32 0.0, %v1785
    %v1787 = vpop.f32.mrb[0].mxu0
    %v1788 = vpop.f32.mrb[0].mxu0
    %v1789 = vpop.f32.mrb[0].mxu0
    %1790 = vdwg.mxu0
    %1791 = vrot.lane.b32.xlu0 %v342, 120
    %v1792 = vpop.permute.xlu0 %1791
    %v1794 = vsel %vm1117, %v1304, 0
    %v1797 = vsel %vm1315, %v1792, 0
    %1799 = vmatprep.subr.bf16.mxu0 0
    %1800 = vmatpush1.bf16.msra.mxu0 %v1797
    %1801 = vmatprep.subr.bf16.mxu0 0
    %1802 = vmatpush1.bf16.msra.mxu0 0
    %1803 = vmatprep.subr.bf16.mxu0 0
    %1804 = vmatpush1.bf16.msra.mxu0 0
    %1805 = vmatprep.subr.bf16.mxu0 0
    %1806 = vmatpush1.bf16.msra.mxu0 0
    %1807 = vmatprep.subr.bf16.mxu0 0
    %1808 = vmatpush1.bf16.msra.mxu0 0
    %1809 = vmatprep.subr.bf16.mxu0 0
    %1810 = vmatpush1.bf16.msra.mxu0 0
    %1811 = vmatprep.subr.bf16.mxu0 0
    %1812 = vmatpush1.bf16.msra.mxu0 0
    %1813 = vmatprep.subr.bf16.mxu0 0
    %1814 = vmatpush1.bf16.msra.mxu0 0
    %1815 = vmatprep.subr.bf16.mxu0 0
    %1816 = vmatpush1.bf16.msra.mxu0 0
    %1817 = vmatprep.subr.bf16.mxu0 0
    %1818 = vmatpush1.bf16.msra.mxu0 0
    %1819 = vmatprep.subr.bf16.mxu0 0
    %1820 = vmatpush1.bf16.msra.mxu0 0
    %1821 = vmatprep.subr.bf16.mxu0 0
    %1822 = vmatpush1.bf16.msra.mxu0 0
    %1823 = vmatprep.subr.bf16.mxu0 0
    %1824 = vmatpush1.bf16.msra.mxu0 0
    %1825 = vmatprep.subr.bf16.mxu0 0
    %1826 = vmatpush1.bf16.msra.mxu0 0
    %1827 = vmatprep.subr.bf16.mxu0 0
    %1828 = vmatpush1.bf16.msra.mxu0 0
    %1829 = vmatprep.subr.bf16.mxu0 0
    %1830 = vmatpush1.bf16.msra.mxu0 0
    %1831 = vmatprep.mubr.bf16.mxu0 0
    %1832 = vmatmul.mubr.bf16.gmra.mrb[0].mxu0 %v1794
    %v1833 = vpop.f32.mrb[0].mxu0
    %v1834 = vadd.f32 0.0, %v1833
    %v1835 = vpop.f32.mrb[0].mxu0
    %v1836 = vpop.f32.mrb[0].mxu0
    %v1837 = vpop.f32.mrb[0].mxu0
    %1838 = vdwg.mxu0
    %1839 = vrot.lane.b32.xlu0 %v343, 120
    %v1840 = vpop.permute.xlu0 %1839
    %v1842 = vsel %vm1117, %v1305, 0
    %v1845 = vsel %vm1315, %v1840, 0
    %1847 = vmatprep.subr.bf16.mxu0 0
    %1848 = vmatpush1.bf16.msra.mxu0 %v1845
    %1849 = vmatprep.subr.bf16.mxu0 0
    %1850 = vmatpush1.bf16.msra.mxu0 0
    %1851 = vmatprep.subr.bf16.mxu0 0
    %1852 = vmatpush1.bf16.msra.mxu0 0
    %1853 = vmatprep.subr.bf16.mxu0 0
    %1854 = vmatpush1.bf16.msra.mxu0 0
    %1855 = vmatprep.subr.bf16.mxu0 0
    %1856 = vmatpush1.bf16.msra.mxu0 0
    %1857 = vmatprep.subr.bf16.mxu0 0
    %1858 = vmatpush1.bf16.msra.mxu0 0
    %1859 = vmatprep.subr.bf16.mxu0 0
    %1860 = vmatpush1.bf16.msra.mxu0 0
    %1861 = vmatprep.subr.bf16.mxu0 0
    %1862 = vmatpush1.bf16.msra.mxu0 0
    %1863 = vmatprep.subr.bf16.mxu0 0
    %1864 = vmatpush1.bf16.msra.mxu0 0
    %1865 = vmatprep.subr.bf16.mxu0 0
    %1866 = vmatpush1.bf16.msra.mxu0 0
    %1867 = vmatprep.subr.bf16.mxu0 0
    %1868 = vmatpush1.bf16.msra.mxu0 0
    %1869 = vmatprep.subr.bf16.mxu0 0
    %1870 = vmatpush1.bf16.msra.mxu0 0
    %1871 = vmatprep.subr.bf16.mxu0 0
    %1872 = vmatpush1.bf16.msra.mxu0 0
    %1873 = vmatprep.subr.bf16.mxu0 0
    %1874 = vmatpush1.bf16.msra.mxu0 0
    %1875 = vmatprep.subr.bf16.mxu0 0
    %1876 = vmatpush1.bf16.msra.mxu0 0
    %1877 = vmatprep.subr.bf16.mxu0 0
    %1878 = vmatpush1.bf16.msra.mxu0 0
    %1879 = vmatprep.mubr.bf16.mxu0 0
    %1880 = vmatmul.mubr.bf16.gmra.mrb[0].mxu0 %v1842
    %v1881 = vpop.f32.mrb[0].mxu0
    %v1882 = vadd.f32 0.0, %v1881
    %v1883 = vpop.f32.mrb[0].mxu0
    %v1884 = vpop.f32.mrb[0].mxu0
    %v1885 = vpop.f32.mrb[0].mxu0
    %1886 = vdwg.mxu0
    %1887 = vrot.lane.b32.xlu0 %v344, 120
    %v1888 = vpop.permute.xlu0 %1887
    %v1890 = vsel %vm1117, %v1306, 0
    %v1893 = vsel %vm1315, %v1888, 0
    %1895 = vmatprep.subr.bf16.mxu0 0
    %1896 = vmatpush1.bf16.msra.mxu0 %v1893
    %1897 = vmatprep.subr.bf16.mxu0 0
    %1898 = vmatpush1.bf16.msra.mxu0 0
    %1899 = vmatprep.subr.bf16.mxu0 0
    %1900 = vmatpush1.bf16.msra.mxu0 0
    %1901 = vmatprep.subr.bf16.mxu0 0
    %1902 = vmatpush1.bf16.msra.mxu0 0
    %1903 = vmatprep.subr.bf16.mxu0 0
    %1904 = vmatpush1.bf16.msra.mxu0 0
    %1905 = vmatprep.subr.bf16.mxu0 0
    %1906 = vmatpush1.bf16.msra.mxu0 0
    %1907 = vmatprep.subr.bf16.mxu0 0
    %1908 = vmatpush1.bf16.msra.mxu0 0
    %1909 = vmatprep.subr.bf16.mxu0 0
    %1910 = vmatpush1.bf16.msra.mxu0 0
    %1911 = vmatprep.subr.bf16.mxu0 0
    %1912 = vmatpush1.bf16.msra.mxu0 0
    %1913 = vmatprep.subr.bf16.mxu0 0
    %1914 = vmatpush1.bf16.msra.mxu0 0
    %1915 = vmatprep.subr.bf16.mxu0 0
    %1916 = vmatpush1.bf16.msra.mxu0 0
    %1917 = vmatprep.subr.bf16.mxu0 0
    %1918 = vmatpush1.bf16.msra.mxu0 0
    %1919 = vmatprep.subr.bf16.mxu0 0
    %1920 = vmatpush1.bf16.msra.mxu0 0
    %1921 = vmatprep.subr.bf16.mxu0 0
    %1922 = vmatpush1.bf16.msra.mxu0 0
    %1923 = vmatprep.subr.bf16.mxu0 0
    %1924 = vmatpush1.bf16.msra.mxu0 0
    %1925 = vmatprep.subr.bf16.mxu0 0
    %1926 = vmatpush1.bf16.msra.mxu0 0
    %1927 = vmatprep.mubr.bf16.mxu0 0
    %1928 = vmatmul.mubr.bf16.gmra.mrb[0].mxu0 %v1890
    %v1929 = vpop.f32.mrb[0].mxu0
    %v1930 = vadd.f32 0.0, %v1929
    %v1931 = vpop.f32.mrb[0].mxu0
    %v1932 = vpop.f32.mrb[0].mxu0
    %v1933 = vpop.f32.mrb[0].mxu0
    %1934 = vdwg.mxu0
    %1935 = vrot.lane.b32.xlu0 %v345, 120
    %v1936 = vpop.permute.xlu0 %1935
    %v1938 = vsel %vm1117, %v1307, 0
    %v1941 = vsel %vm1315, %v1936, 0
    %1943 = vmatprep.subr.bf16.mxu0 0
    %1944 = vmatpush1.bf16.msra.mxu0 %v1941
    %1945 = vmatprep.subr.bf16.mxu0 0
    %1946 = vmatpush1.bf16.msra.mxu0 0
    %1947 = vmatprep.subr.bf16.mxu0 0
    %1948 = vmatpush1.bf16.msra.mxu0 0
    %1949 = vmatprep.subr.bf16.mxu0 0
    %1950 = vmatpush1.bf16.msra.mxu0 0
    %1951 = vmatprep.subr.bf16.mxu0 0
    %1952 = vmatpush1.bf16.msra.mxu0 0
    %1953 = vmatprep.subr.bf16.mxu0 0
    %1954 = vmatpush1.bf16.msra.mxu0 0
    %1955 = vmatprep.subr.bf16.mxu0 0
    %1956 = vmatpush1.bf16.msra.mxu0 0
    %1957 = vmatprep.subr.bf16.mxu0 0
    %1958 = vmatpush1.bf16.msra.mxu0 0
    %1959 = vmatprep.subr.bf16.mxu0 0
    %1960 = vmatpush1.bf16.msra.mxu0 0
    %1961 = vmatprep.subr.bf16.mxu0 0
    %1962 = vmatpush1.bf16.msra.mxu0 0
    %1963 = vmatprep.subr.bf16.mxu0 0
    %1964 = vmatpush1.bf16.msra.mxu0 0
    %1965 = vmatprep.subr.bf16.mxu0 0
    %1966 = vmatpush1.bf16.msra.mxu0 0
    %1967 = vmatprep.subr.bf16.mxu0 0
    %1968 = vmatpush1.bf16.msra.mxu0 0
    %1969 = vmatprep.subr.bf16.mxu0 0
    %1970 = vmatpush1.bf16.msra.mxu0 0
    %1971 = vmatprep.subr.bf16.mxu0 0
    %1972 = vmatpush1.bf16.msra.mxu0 0
    %1973 = vmatprep.subr.bf16.mxu0 0
    %1974 = vmatpush1.bf16.msra.mxu0 0
    %1975 = vmatprep.mubr.bf16.mxu0 0
    %1976 = vmatmul.mubr.bf16.gmra.mrb[0].mxu0 %v1938
    %v1977 = vpop.f32.mrb[0].mxu0
    %v1978 = vadd.f32 0.0, %v1977
    %v1979 = vpop.f32.mrb[0].mxu0
    %v1980 = vpop.f32.mrb[0].mxu0
    %v1981 = vpop.f32.mrb[0].mxu0
    %1982 = vdwg.mxu0
    %1983 = vrot.lane.b32.xlu0 %v346, 120
    %v1984 = vpop.permute.xlu0 %1983
    %v1986 = vsel %vm1117, %v1308, 0
    %v1989 = vsel %vm1315, %v1984, 0
    %1991 = vmatprep.subr.bf16.mxu0 0
    %1992 = vmatpush1.bf16.msra.mxu0 %v1989
    %1993 = vmatprep.subr.bf16.mxu0 0
    %1994 = vmatpush1.bf16.msra.mxu0 0
    %1995 = vmatprep.subr.bf16.mxu0 0
    %1996 = vmatpush1.bf16.msra.mxu0 0
    %1997 = vmatprep.subr.bf16.mxu0 0
    %1998 = vmatpush1.bf16.msra.mxu0 0
    %1999 = vmatprep.subr.bf16.mxu0 0
    %2000 = vmatpush1.bf16.msra.mxu0 0
    %2001 = vmatprep.subr.bf16.mxu0 0
    %2002 = vmatpush1.bf16.msra.mxu0 0
    %2003 = vmatprep.subr.bf16.mxu0 0
    %2004 = vmatpush1.bf16.msra.mxu0 0
    %2005 = vmatprep.subr.bf16.mxu0 0
    %2006 = vmatpush1.bf16.msra.mxu0 0
    %2007 = vmatprep.subr.bf16.mxu0 0
    %2008 = vmatpush1.bf16.msra.mxu0 0
    %2009 = vmatprep.subr.bf16.mxu0 0
    %2010 = vmatpush1.bf16.msra.mxu0 0
    %2011 = vmatprep.subr.bf16.mxu0 0
    %2012 = vmatpush1.bf16.msra.mxu0 0
    %2013 = vmatprep.subr.bf16.mxu0 0
    %2014 = vmatpush1.bf16.msra.mxu0 0
    %2015 = vmatprep.subr.bf16.mxu0 0
    %2016 = vmatpush1.bf16.msra.mxu0 0
    %2017 = vmatprep.subr.bf16.mxu0 0
    %2018 = vmatpush1.bf16.msra.mxu0 0
    %2019 = vmatprep.subr.bf16.mxu0 0
    %2020 = vmatpush1.bf16.msra.mxu0 0
    %2021 = vmatprep.subr.bf16.mxu0 0
    %2022 = vmatpush1.bf16.msra.mxu0 0
    %2023 = vmatprep.mubr.bf16.mxu0 0
    %2024 = vmatmul.mubr.bf16.gmra.mrb[0].mxu0 %v1986
    %v2025 = vpop.f32.mrb[0].mxu0
    %v2026 = vadd.f32 0.0, %v2025
    %v2027 = vpop.f32.mrb[0].mxu0
    %v2028 = vpop.f32.mrb[0].mxu0
    %v2029 = vpop.f32.mrb[0].mxu0
    %2030 = vdwg.mxu0
    %2031 = vrot.lane.b32.xlu0 %v347, 120
    %v2032 = vpop.permute.xlu0 %2031
    %v2034 = vsel %vm1117, %v1309, 0
    %v2037 = vsel %vm1315, %v2032, 0
    %2039 = vmatprep.subr.bf16.mxu0 0
    %2040 = vmatpush1.bf16.msra.mxu0 %v2037
    %2041 = vmatprep.subr.bf16.mxu0 0
    %2042 = vmatpush1.bf16.msra.mxu0 0
    %2043 = vmatprep.subr.bf16.mxu0 0
    %2044 = vmatpush1.bf16.msra.mxu0 0
    %2045 = vmatprep.subr.bf16.mxu0 0
    %2046 = vmatpush1.bf16.msra.mxu0 0
    %2047 = vmatprep.subr.bf16.mxu0 0
    %2048 = vmatpush1.bf16.msra.mxu0 0
    %2049 = vmatprep.subr.bf16.mxu0 0
    %2050 = vmatpush1.bf16.msra.mxu0 0
    %2051 = vmatprep.subr.bf16.mxu0 0
    %2052 = vmatpush1.bf16.msra.mxu0 0
    %2053 = vmatprep.subr.bf16.mxu0 0
    %2054 = vmatpush1.bf16.msra.mxu0 0
    %2055 = vmatprep.subr.bf16.mxu0 0
    %2056 = vmatpush1.bf16.msra.mxu0 0
    %2057 = vmatprep.subr.bf16.mxu0 0
    %2058 = vmatpush1.bf16.msra.mxu0 0
    %2059 = vmatprep.subr.bf16.mxu0 0
    %2060 = vmatpush1.bf16.msra.mxu0 0
    %2061 = vmatprep.subr.bf16.mxu0 0
    %2062 = vmatpush1.bf16.msra.mxu0 0
    %2063 = vmatprep.subr.bf16.mxu0 0
    %2064 = vmatpush1.bf16.msra.mxu0 0
    %2065 = vmatprep.subr.bf16.mxu0 0
    %2066 = vmatpush1.bf16.msra.mxu0 0
    %2067 = vmatprep.subr.bf16.mxu0 0
    %2068 = vmatpush1.bf16.msra.mxu0 0
    %2069 = vmatprep.subr.bf16.mxu0 0
    %2070 = vmatpush1.bf16.msra.mxu0 0
    %2071 = vmatprep.mubr.bf16.mxu0 0
    %2072 = vmatmul.mubr.bf16.gmra.mrb[0].mxu0 %v2034
    %v2073 = vpop.f32.mrb[0].mxu0
    %v2074 = vadd.f32 0.0, %v2073
    %v2075 = vpop.f32.mrb[0].mxu0
    %v2076 = vpop.f32.mrb[0].mxu0
    %v2077 = vpop.f32.mrb[0].mxu0
    %2078 = vdwg.mxu0
    %v2079 = vpack.c.bf16 %v1354, %v1354
    %v2080 = vpack.c.bf16 %v1402, %v1402
    %v2081 = vpack.c.bf16 %v1450, %v1450
    %v2082 = vpack.c.bf16 %v1498, %v1498
    %v2083 = vpack.c.bf16 %v1546, %v1546
    %v2084 = vpack.c.bf16 %v1594, %v1594
    %v2085 = vpack.c.bf16 %v1642, %v1642
    %v2086 = vpack.c.bf16 %v1690, %v1690
    %v2087 = vpack.c.bf16 %v1738, %v1738
    %v2088 = vpack.c.bf16 %v1786, %v1786
    %v2089 = vpack.c.bf16 %v1834, %v1834
    %v2090 = vpack.c.bf16 %v1882, %v1882
    %v2091 = vpack.c.bf16 %v1930, %v1930
    %v2092 = vpack.c.bf16 %v1978, %v1978
    %v2093 = vpack.c.bf16 %v2026, %v2026
    %v2094 = vpack.c.bf16 %v2074, %v2074
    %2097 = vrot.lane.b32.xlu0 %v2081, 4
    %v2098 = vpop.permute.xlu0 %2097
    %2099 = vrot.lane.b32.xlu0 %v2082, 4
    %v2100 = vpop.permute.xlu0 %2099
    %2103 = vrot.lane.b32.xlu0 %v2083, 8
    %v2104 = vpop.permute.xlu0 %2103
    %2105 = vrot.lane.b32.xlu0 %v2084, 8
    %v2106 = vpop.permute.xlu0 %2105
    %2109 = vrot.lane.b32.xlu0 %v2085, 12
    %v2110 = vpop.permute.xlu0 %2109
    %2111 = vrot.lane.b32.xlu0 %v2086, 12
    %v2112 = vpop.permute.xlu0 %2111
    %2115 = vrot.lane.b32.xlu0 %v2087, 16
    %v2116 = vpop.permute.xlu0 %2115
    %2117 = vrot.lane.b32.xlu0 %v2088, 16
    %v2118 = vpop.permute.xlu0 %2117
    %2121 = vrot.lane.b32.xlu0 %v2089, 20
    %v2122 = vpop.permute.xlu0 %2121
    %2123 = vrot.lane.b32.xlu0 %v2090, 20
    %v2124 = vpop.permute.xlu0 %2123
    %2127 = vrot.lane.b32.xlu0 %v2091, 24
    %v2128 = vpop.permute.xlu0 %2127
    %2129 = vrot.lane.b32.xlu0 %v2092, 24
    %v2130 = vpop.permute.xlu0 %2129
    %2133 = vrot.lane.b32.xlu0 %v2093, 28
    %v2134 = vpop.permute.xlu0 %2133
    %2135 = vrot.lane.b32.xlu0 %v2094, 28
    %v2136 = vpop.permute.xlu0 %2135
    %v2139 = vsel %vm350, %v2079, %v2098
    %v2142 = vsel %vm350, %v2080, %v2100
    %v2144 = vsel %vm1117, %v2139, %v2104
    %v2146 = vsel %vm1117, %v2142, %v2106
    %vm2147 = vcmask 97280
    %v2149 = vsel %vm2147, %v2144, %v2110
    %v2151 = vsel %vm2147, %v2146, %v2112
    %vm2152 = vcmask 130048
    %v2154 = vsel %vm2152, %v2149, %v2116
    %v2156 = vsel %vm2152, %v2151, %v2118
    %vm2157 = vcmask 162816
    %v2159 = vsel %vm2157, %v2154, %v2122
    %v2161 = vsel %vm2157, %v2156, %v2124
    %vm2162 = vcmask 195584
    %v2164 = vsel %vm2162, %v2159, %v2128
    %v2166 = vsel %vm2162, %v2161, %v2130
    %vm2167 = vcmask 228352
    %v2169 = vsel %vm2167, %v2164, %v2134
    %v2171 = vsel %vm2167, %v2166, %v2136
    %v2172 = vld [vmem:[%s1] sm:$0xf]
    %v2173 = vld [vmem:[%s1 + $0xc] sm:$0xf]
    %v2174 = vld [vmem:[%s1 + $0x18] sm:$0xf]
    %v2175 = vld [vmem:[%s1 + $0x24] sm:$0xf]
    %v2176 = vld [vmem:[%s3] sm:$0x1]
    %v2178 = vlaneseq
    %v2179 = vshrl.u32 %v2178, 7
    %v2180 = vsub.s32 0, %v2179
    %v2181 = vrot.slane %v2176, %v2180
    %v2184 = vunpack.c.l.b16 %v2169
    %v2185 = vunpack.c.l.b16 %v2171
    %v2186 = vpack.c.b16 %v2185, %v2184
    %v2191 = vunpack.c.l.b16 %v2172
    %v2192 = vunpack.c.l.b16 %v2173
    %v2193 = vunpack.c.l.b16 %v2174
    %v2194 = vunpack.c.l.b16 %v2175
    %v2195 = vpack.c.b16 %v2192, %v2191
    %v2196 = vpack.c.b16 %v2194, %v2193
    %2197 = vrot.lane.b32.xlu0 %v2195, 32
    %v2198 = vpop.permute.xlu0 %2197
    %2199 = vrot.lane.b32.xlu0 %v2196, 32
    %v2200 = vpop.permute.xlu0 %2199
    %2203 = vrot.lane.b32.xlu0 %v2181, 32
    %v2204 = vpop.permute.xlu0 %2203
    %v2207 = vsel %vm61, %v2186, 0
    %2209 = vmatprep.subr.bf16.mxu0 0
    %2210 = vmatpush1.bf16.msra.mxu0 %v2198
    %2211 = vmatprep.subr.bf16.mxu0 0
    %2212 = vmatpush1.bf16.msra.mxu0 %v2200
    %2213 = vmatprep.subr.bf16.mxu0 0
    %2214 = vmatpush1.bf16.msra.mxu0 0
    %2215 = vmatprep.subr.bf16.mxu0 0
    %2216 = vmatpush1.bf16.msra.mxu0 0
    %2217 = vmatprep.subr.bf16.mxu0 0
    %2218 = vmatpush1.bf16.msra.mxu0 0
    %2219 = vmatprep.subr.bf16.mxu0 0
    %2220 = vmatpush1.bf16.msra.mxu0 0
    %2221 = vmatprep.subr.bf16.mxu0 0
    %2222 = vmatpush1.bf16.msra.mxu0 0
    %2223 = vmatprep.subr.bf16.mxu0 0
    %2224 = vmatpush1.bf16.msra.mxu0 0
    %2225 = vmatprep.subr.bf16.mxu0 0
    %2226 = vmatpush1.bf16.msra.mxu0 0
    %2227 = vmatprep.subr.bf16.mxu0 0
    %2228 = vmatpush1.bf16.msra.mxu0 0
    %2229 = vmatprep.subr.bf16.mxu0 0
    %2230 = vmatpush1.bf16.msra.mxu0 0
    %2231 = vmatprep.subr.bf16.mxu0 0
    %2232 = vmatpush1.bf16.msra.mxu0 0
    %2233 = vmatprep.subr.bf16.mxu0 0
    %2234 = vmatpush1.bf16.msra.mxu0 0
    %2235 = vmatprep.subr.bf16.mxu0 0
    %2236 = vmatpush1.bf16.msra.mxu0 0
    %2237 = vmatprep.subr.bf16.mxu0 0
    %2238 = vmatpush1.bf16.msra.mxu0 0
    %2239 = vmatprep.subr.bf16.mxu0 0
    %2240 = vmatpush1.bf16.msra.mxu0 0
    %2241 = vmatprep.mubr.bf16.mxu0 0
    %2242 = vmatmul.mubr.bf16.gmra.mrb[0].mxu0 %v2207
    %v2243 = vpop.f32.mrb[0].mxu0
    %v2244 = vadd.f32 %v2204, %v2243
    %v2245 = vpop.f32.mrb[0].mxu0
    %v2246 = vpop.f32.mrb[0].mxu0
    %v2247 = vadd.f32 %v2204, %v2246
    %v2248 = vpop.f32.mrb[0].mxu0
    %2249 = vdwg.mxu0
    %v2250 = vadd.f32 %v230, %v2244
    %v2251 = vadd.f32 %v231, %v2247
    %v2252 = vld [vmem:[%s3 + $0x1] sm:$0x1]
    %v2253 = vsel %vm61, %v2250, 0.0
    %2254 = vadd.xlane.f32.xlu0 %v2253
    %v2255 = vpop.xlane.xlu0 %2254
    %v2256 = vsel %vm61, %v2251, 0.0
    %2257 = vadd.xlane.f32.xlu0 %v2256
    %v2258 = vpop.xlane.xlu0 %2257
    %v2259 = vmul.f32 %v2255, %v201
    %v2260 = vmul.f32 %v2258, %v201
    %v2261 = vsub.f32 %v2250, %v2259
    %v2262 = vsub.f32 %v2251, %v2260
    %v2263 = vmul.f32 %v2261, %v2261
    %v2264 = vmul.f32 %v2262, %v2262
    %v2265 = vsel %vm61, %v2263, 0.0
    %2266 = vadd.xlane.f32.xlu0 %v2265
    %v2267 = vpop.xlane.xlu0 %2266
    %v2268 = vsel %vm61, %v2264, 0.0
    %2269 = vadd.xlane.f32.xlu0 %v2268
    %v2270 = vpop.xlane.xlu0 %2269
    %v2271 = vmul.f32 %v2267, %v201
    %v2272 = vmul.f32 %v2270, %v201
    %v2273 = vadd.f32 %v2271, 1e-05
    %v2274 = vadd.f32 %v2272, 1e-05
    %v2275 = vrsqrt.pop %v2273
    %v2276 = vrsqrt.pop %v2274
    %v2277 = vmul.f32 %v2261, %v2275
    %v2278 = vmul.f32 %v2262, %v2276
    %v2280 = vlaneseq
    %v2281 = vshrl.u32 %v2280, 7
    %v2282 = vsub.s32 0, %v2281
    %v2283 = vrot.slane %v2252, %v2282
    %v2285 = vmul.f32 %v2277, %v2283
    %v2286 = vmul.f32 %v2278, %v2283
    %2287 = vrot.lane.b32.xlu0 %v2283, 96
    %v2288 = vpop.permute.xlu0 %2287
    %v2290 = vadd.f32 %v2285, %v2288
    %v2291 = vadd.f32 %v2286, %v2288
    %v2292 = vpack.c.bf16 %v2291, %v2290
    %v2293 = vld [vmem:[%s1 + $0x4] sm:$0xf]
    %v2294 = vld [vmem:[%s1 + $0x10] sm:$0xf]
    %v2295 = vld [vmem:[%s1 + $0x1c] sm:$0xf]
    %v2296 = vld [vmem:[%s1 + $0x28] sm:$0xf]
    %v2297 = vld [vmem:[%s3 + $0x1] sm:$0x3]
    %v2299 = vlaneseq
    %v2300 = vshrl.u32 %v2299, 7
    %v2301 = vsub.s32 0, %v2300
    %v2302 = vrot.slane %v2297, %v2301
    %v2303 = vlaneseq
    %v2304 = vshrl.u32 %v2303, 7
    %v2305 = vsub.s32 1, %v2304
    %v2306 = vrot.slane %v2297, %v2305
    %v2311 = vunpack.c.l.b16 %v2293
    %v2312 = vunpack.c.l.b16 %v2294
    %v2313 = vunpack.c.l.b16 %v2295
    %v2314 = vunpack.c.l.b16 %v2296
    %v2315 = vpack.c.b16 %v2312, %v2311
    %v2316 = vpack.c.b16 %v2314, %v2313
    %2319 = vrot.lane.b32.xlu0 %v2302, 64
    %v2320 = vpop.permute.xlu0 %2319
    %2321 = vrot.lane.b32.xlu0 %v2306, 64
    %v2322 = vpop.permute.xlu0 %2321
    %v2323 = vsel %vm148, %v2320, %v2322
    %v2326 = vsel %vm61, %v2292, 0
    %2328 = vmatprep.subr.bf16.mxu0 0
    %2329 = vmatpush1.bf16.msra.mxu0 %v2315
    %2330 = vmatprep.subr.bf16.mxu0 0
    %2331 = vmatpush1.bf16.msra.mxu0 %v2316
    %2332 = vmatprep.subr.bf16.mxu0 0
    %2333 = vmatpush1.bf16.msra.mxu0 0
    %2334 = vmatprep.subr.bf16.mxu0 0
    %2335 = vmatpush1.bf16.msra.mxu0 0
    %2336 = vmatprep.subr.bf16.mxu0 0
    %2337 = vmatpush1.bf16.msra.mxu0 0
    %2338 = vmatprep.subr.bf16.mxu0 0
    %2339 = vmatpush1.bf16.msra.mxu0 0
    %2340 = vmatprep.subr.bf16.mxu0 0
    %2341 = vmatpush1.bf16.msra.mxu0 0
    %2342 = vmatprep.subr.bf16.mxu0 0
    %2343 = vmatpush1.bf16.msra.mxu0 0
    %2344 = vmatprep.subr.bf16.mxu0 0
    %2345 = vmatpush1.bf16.msra.mxu0 0
    %2346 = vmatprep.subr.bf16.mxu0 0
    %2347 = vmatpush1.bf16.msra.mxu0 0
    %2348 = vmatprep.subr.bf16.mxu0 0
    %2349 = vmatpush1.bf16.msra.mxu0 0
    %2350 = vmatprep.subr.bf16.mxu0 0
    %2351 = vmatpush1.bf16.msra.mxu0 0
    %2352 = vmatprep.subr.bf16.mxu0 0
    %2353 = vmatpush1.bf16.msra.mxu0 0
    %2354 = vmatprep.subr.bf16.mxu0 0
    %2355 = vmatpush1.bf16.msra.mxu0 0
    %2356 = vmatprep.subr.bf16.mxu0 0
    %2357 = vmatpush1.bf16.msra.mxu0 0
    %2358 = vmatprep.subr.bf16.mxu0 0
    %2359 = vmatpush1.bf16.msra.mxu0 0
    %2360 = vmatprep.mubr.bf16.mxu0 0
    %2361 = vmatmul.mubr.bf16.gmra.mrb[0].mxu0 %v2326
    %v2362 = vpop.f32.mrb[0].mxu0
    %v2363 = vadd.f32 %v2323, %v2362
    %v2364 = vpop.f32.mrb[0].mxu0
    %v2365 = vpop.f32.mrb[0].mxu0
    %v2366 = vadd.f32 %v2323, %v2365
    %v2367 = vpop.f32.mrb[0].mxu0
    %2368 = vdwg.mxu0
    %v2369 = vpack.c.bf16 %v2366, %v2363
    %v2371 = vunpack.c.l.b16 %v2369
    %v2372 = vunpack.c.h.b16 %v2369
    %v2373 = vpack.c.b16 %v2371, %v2371
    %v2374 = vpack.c.b16 %v2372, %v2372
    %2377 = vst [vmem:[#allocation5] sm:$0xf] %v2373
    %2378 = vst [vmem:[#allocation5 + $0x4] sm:$0xf] %v2374
    // Predicated region
    $region22: #{tpu_custom_call.1} parent=1 // pred_check
      _
    $region23: #{tpu_custom_call.1} parent=1 // pred_check_branch
      %2380 = sbr.rel (0) target = $region25
    $region24: #{tpu_custom_call.1} parent=1 // pred_region
      %s2382 = ssub.s32 128, 128
      %2383 = vsyncadd [#allocation4], %s2382
      %s2384 = sshll.u32 [#allocation5], 4
      %s2385 = int_to_ptr.vmem [resolvable:$true] %s2384
      %2390 = dma.vmem_to_hbm [thread:$0]  %s2385, 128, %s4, [#allocation4], 64, 64, 4
    $region25: #{tpu_custom_call.1} parent=1 // pred_fallthru
      _
    // Predicated region
    $region26: #{tpu_custom_call.1} parent=1 // pred_check
      _
    $region27: #{tpu_custom_call.1} parent=1 // pred_check_branch
      %2392 = sbr.rel (0) target = $region29
    $region28: #{tpu_custom_call.1} parent=1 // pred_region
      %2393 = dma.done [#allocation4], 128
    $region29: #{tpu_custom_call.1} parent=1 // pred_fallthru
      _
    %2394 = vsyncpa [#allocation3], 1
    %2395 = vsyncpa [#allocation4], 1

</llo_original>
